<compile_context>
chip_gen: v7x
topology: tpu7x:2x2x1
jax: 0.10.0
libtpu: 0.0.40
codegen_flags: <defaults>
</compile_context>

<pallas_src>
import jax
import jax.numpy as jnp
import numpy as np
from jax import lax
from jax.experimental import pallas as pl
from jax.experimental.pallas import tpu as pltpu

BN_EPS = 1e-5


# ---------------------------------------------------------------------------
# Fused BasicBlock kernel
# ---------------------------------------------------------------------------
def _tap(ref, kh, kw, ho, wo, stride):
    """(ho, wo, C) window of a zero-padded (Hp, Wp, C) VMEM ref for tap (kh, kw)."""
    if stride == 1:
        return ref[kh:kh + ho, kw:kw + wo, :]
    # TODO(synk): for stride==2, a one-time even/odd column pre-split would
    # replace these strided sublane reads with contiguous ones.
    return ref[pl.ds(kh, ho, stride=stride), pl.ds(kw, wo, stride=stride), :]


def _make_block_kernel(H, W, Cin, Cmid, Cout, stride, has_sc, mxu_dtype):
    Ho = (H - 1) // stride + 1
    Wo = (W - 1) // stride + 1

    def kernel(*refs):
        if has_sc:
            (x_ref, w1_ref, s1_ref, b1_ref, w2_ref, s2_ref, b2_ref,
             ssc_ref, bsc_ref, o_ref, xp_ref, midp_ref) = refs
        else:
            (x_ref, w1_ref, s1_ref, b1_ref, w2_ref, s2_ref, b2_ref,
             o_ref, xp_ref, midp_ref) = refs
        f32 = jnp.float32

        # ---- zero ONLY the halos (interior is fully overwritten below) ----
        xp_ref[0:1, :, :] = jnp.zeros((1, W + 2, Cin), f32)
        xp_ref[H + 1:H + 2, :, :] = jnp.zeros((1, W + 2, Cin), f32)
        xp_ref[:, 0:1, :] = jnp.zeros((H + 2, 1, Cin), f32)
        xp_ref[:, W + 1:W + 2, :] = jnp.zeros((H + 2, 1, Cin), f32)
        midp_ref[0:1, :, :] = jnp.zeros((1, Wo + 2, Cmid), f32)
        midp_ref[Ho + 1:Ho + 2, :, :] = jnp.zeros((1, Wo + 2, Cmid), f32)
        midp_ref[:, 0:1, :] = jnp.zeros((Ho + 2, 1, Cmid), f32)
        midp_ref[:, Wo + 1:Wo + 2, :] = jnp.zeros((Ho + 2, 1, Cmid), f32)

        # Padded input lives entirely in VMEM (no HBM jnp.pad pass).
        xp_ref[1:H + 1, 1:W + 1, :] = x_ref[0]

        # ---- conv1 (3x3, stride) [+ fused 1x1 shortcut] : ONE matmul -------
        taps1 = []
        for kh in range(3):
            for kw in range(3):
                taps1.append(
                    _tap(xp_ref, kh, kw, Ho, Wo, stride).reshape(Ho * Wo, Cin))
        lhs1 = jnp.concatenate(taps1, axis=-1)                 # (Ho*Wo, 9*Cin)
        res1 = jnp.dot(lhs1.astype(mxu_dtype), w1_ref[...],
                       preferred_element_type=jnp.float32)

        acc1 = res1[:, :Cmid]
        mid = jnp.maximum(acc1 * s1_ref[...] + b1_ref[...], 0.0)
        midp_ref[1:Ho + 1, 1:Wo + 1, :] = mid.reshape(Ho, Wo, Cmid)

        if has_sc:
            # 1x1-conv shortcut result came out of the same matmul.
            sc = res1[:, Cmid:Cmid + Cout] * ssc_ref[...] + bsc_ref[...]
        else:
            sc = x_ref[0].reshape(Ho * Wo, Cout)               # identity

        # ---- conv2 (3x3, stride 1) : ONE matmul ----------------------------
        taps2 = []
        for kh in range(3):
            for kw in range(3):
                taps2.append(
                    midp_ref[kh:kh + Ho, kw:kw + Wo, :].reshape(Ho * Wo, Cmid))
        lhs2 = jnp.concatenate(taps2, axis=-1)                 # (Ho*Wo, 9*Cmid)
        acc2 = jnp.dot(lhs2.astype(mxu_dtype), w2_ref[...],
                       preferred_element_type=jnp.float32)

        out = jnp.maximum(acc2 * s2_ref[...] + b2_ref[...] + sc, 0.0)
        # Lane-dense, NCHW-flat store: (Cout, Ho*Wo) slab.
        o_ref[0] = out.T.astype(o_ref.dtype)

    return kernel, Ho, Wo


# ---------------------------------------------------------------------------
# Wrapper
# ---------------------------------------------------------------------------
def fold_bn(gamma, beta, mean, var, eps=BN_EPS):
    scale = gamma / jnp.sqrt(var + eps)
    bias = beta - mean * scale
    return scale.astype(jnp.float32), bias.astype(jnp.float32)


def basic_block_forward(x_nchw, p, in_planes, planes, stride,
                        compute_dtype=jnp.float32):
    """Fused BasicBlock forward.  x_nchw: (N, Cin, H, W) -> (N, planes, Ho, Wo)."""
    N, Cin, H, W = x_nchw.shape
    assert Cin == in_planes
    Cmid = Cout = planes
    has_sc = (stride != 1) or (in_planes != planes)

    x = jnp.transpose(x_nchw, (0, 2, 3, 1)).astype(jnp.float32)   # NHWC
    s1, b1 = fold_bn(*p["bn1"])
    s2, b2 = fold_bn(*p["bn2"])

    # im2col weight layout: row index = kh*3*Cin + kw*Cin + cin  (matches the
    # kernel's tap-concatenation order).
    w1_mat = p["w1"].reshape(9 * Cin, Cmid)
    if has_sc:
        wsc_rows = jnp.zeros((9 * Cin, Cout), jnp.float32)
        wsc_rows = wsc_rows.at[4 * Cin:5 * Cin, :].set(p["w_sc"])   # center tap
        w1_mat = jnp.concatenate([w1_mat, wsc_rows], axis=1)        # fuse 1x1 sc
    w2_mat = p["w2"].reshape(9 * Cmid, Cout)

    kernel, Ho, Wo = _make_block_kernel(H, W, Cin, Cmid, Cout, stride, has_sc,
                                        compute_dtype)

    def full(*shape):
        return pl.BlockSpec(shape, lambda n: (0,) * len(shape))

    in_specs = [
        pl.BlockSpec((1, H, W, Cin), lambda n: (n, 0, 0, 0)),
        full(*w1_mat.shape),
        full(1, Cmid), full(1, Cmid),
        full(9 * Cmid, Cout), full(1, Cout), full(1, Cout),
    ]
    args = [x,
            w1_mat.astype(compute_dtype),
            s1.reshape(1, Cmid), b1.reshape(1, Cmid),
            w2_mat.astype(compute_dtype),
            s2.reshape(1, Cout), b2.reshape(1, Cout)]
    if has_sc:
        ssc, bsc = fold_bn(*p["bn_sc"])
        in_specs += [full(1, Cout), full(1, Cout)]
        args += [ssc.reshape(1, Cout), bsc.reshape(1, Cout)]

    flops = N * (2 * Ho * Wo * (9 * Cin) * w1_mat.shape[1]
                 + 2 * Ho * Wo * (9 * Cmid) * Cout)
    nbytes = lambda a: int(a.size) * a.dtype.itemsize
    bytes_accessed = int(nbytes(x) + N * Cout * Ho * Wo * 4
                         + sum(nbytes(a) for a in args[1:]))

    out = pl.pallas_call(
        kernel,
        out_shape=jax.ShapeDtypeStruct((N, Cout, Ho * Wo), jnp.float32),
        grid=(N,),
        in_specs=in_specs,
        out_specs=pl.BlockSpec((1, Cout, Ho * Wo), lambda n: (n, 0, 0)),
        scratch_shapes=[
            pltpu.VMEM((H + 2, W + 2, Cin), jnp.float32),      # padded x
            pltpu.VMEM((Ho + 2, Wo + 2, Cmid), jnp.float32),   # padded conv1 out
        ],
        compiler_params=pltpu.CompilerParams(
            dimension_semantics=("parallel",),
            vmem_limit_bytes=32 * 1024 * 1024),
        cost_estimate=pl.CostEstimate(flops=flops, transcendentals=0,
                                      bytes_accessed=bytes_accessed),
    )(*args)
    # Output slab is already NCHW-flat; only a free reshape remains.
    return out.reshape(N, Cout, Ho, Wo)


# ---------------------------------------------------------------------------
# Deterministic params + pure-JAX reference
# ---------------------------------------------------------------------------
def init_params(key, in_planes, planes, stride):
    ks = jax.random.split(key, 6)

    def bn_params(k, c):
        k1, k2, k3, k4 = jax.random.split(k, 4)
        gamma = 1.0 + 0.1 * jax.random.normal(k1, (c,), jnp.float32)
        beta = 0.1 * jax.random.normal(k2, (c,), jnp.float32)
        mean = 0.1 * jax.random.normal(k3, (c,), jnp.float32)
        var = jax.random.uniform(k4, (c,), jnp.float32, 0.5, 1.5)
        return (gamma, beta, mean, var)

    p = {
        "w1": 0.2 * jax.random.normal(ks[0], (3, 3, in_planes, planes),
                                      jnp.float32),
        "bn1": bn_params(ks[1], planes),
        "w2": 0.2 * jax.random.normal(ks[2], (3, 3, planes, planes),
                                      jnp.float32),
        "bn2": bn_params(ks[3], planes),
    }
    if stride != 1 or in_planes != planes:
        p["w_sc"] = 0.2 * jax.random.normal(ks[4], (in_planes, planes),
                                            jnp.float32)
        p["bn_sc"] = bn_params(ks[5], planes)
    return p


def reference_forward(x_nchw, p, in_planes, planes, stride):
    x = jnp.transpose(x_nchw, (0, 2, 3, 1))

    def conv(inp, w, st, pad):
        return lax.conv_general_dilated(
            inp, w, window_strides=(st, st), padding=pad,
            dimension_numbers=("NHWC", "HWIO", "NHWC"))

    def bn(inp, prm):
        g, b, m, v = prm
        return (inp - m) / jnp.sqrt(v + BN_EPS) * g + b

    out = jax.nn.relu(bn(conv(x, p["w1"], stride, ((1, 1), (1, 1))), p["bn1"]))
    out = bn(conv(out, p["w2"], 1, ((1, 1), (1, 1))), p["bn2"])
    if stride != 1 or in_planes != planes:
        sc = conv(x, p["w_sc"].reshape(1, 1, in_planes, planes), stride,
                  ((0, 0), (0, 0)))
        sc = bn(sc, p["bn_sc"])
    else:
        sc = x
    out = jax.nn.relu(out + sc)
    return jnp.transpose(out, (0, 3, 1, 2))


# ---------------------------------------------------------------------------
if __name__ == "__main__":
    key = jax.random.PRNGKey(0)

    def run_case(in_planes, planes, stride, kseed, N=2, H=16, W=16):
        kx, kp = jax.random.split(jax.random.fold_in(key, kseed))
        x = jax.random.normal(kx, (N, in_planes, H, W), jnp.float32)  # NCHW
        params = init_params(kp, in_planes, planes, stride)

        ref = jax.block_until_ready(
            reference_forward(x, params, in_planes, planes, stride))

        # f32 MXU operands: tight-tolerance regression test.
        out = jax.block_until_ready(
            basic_block_forward(x, params, in_planes, planes, stride,
                                compute_dtype=jnp.float32))
        assert out.shape == ref.shape
        np.testing.assert_allclose(np.asarray(out), np.asarray(ref),
                                   rtol=1e-4, atol=1e-4)

        # bf16 MXU operands (v6e/v7x fast path): loose tolerance.
        out_bf16 = jax.block_until_ready(
            basic_block_forward(x, params, in_planes, planes, stride,
                                compute_dtype=jnp.bfloat16))
        np.testing.assert_allclose(np.asarray(out_bf16), np.asarray(ref),
                                   rtol=1e-1, atol=1e-1)

    run_case(4, 8, stride=2, kseed=0)   # strided path + fused 1x1 shortcut
    run_case(8, 8, stride=1, kseed=1)   # stride-1 path + identity shortcut
    print("KERNEL_OK")
</pallas_src>

<mosaic_0001>
module attributes {stable_mosaic.version = 11 : i64} {
  func.func @kernel(%arg0: i32, %arg1: memref<1x16x16x4xf32, #tpu.memory_space<vmem>>, %arg2: memref<36x16xf32, #tpu.memory_space<vmem>>, %arg3: memref<1x8xf32, #tpu.memory_space<vmem>>, %arg4: memref<1x8xf32, #tpu.memory_space<vmem>>, %arg5: memref<72x8xf32, #tpu.memory_space<vmem>>, %arg6: memref<1x8xf32, #tpu.memory_space<vmem>>, %arg7: memref<1x8xf32, #tpu.memory_space<vmem>>, %arg8: memref<1x8xf32, #tpu.memory_space<vmem>>, %arg9: memref<1x8xf32, #tpu.memory_space<vmem>>, %arg10: memref<1x8x64xf32, #tpu.memory_space<vmem>>, %arg11: memref<18x18x4xf32, #tpu.memory_space<vmem>>, %arg12: memref<10x10x8xf32, #tpu.memory_space<vmem>>) attributes {dimension_semantics = [#tpu.dimension_semantics<parallel>], iteration_bounds = array<i64: 2>, scalar_prefetch = 0 : i64, scratch_operands = 2 : i64, tpu.core_type = #tpu.core_type<tc>, window_params = [{transform_indices = @transform_0, window_bounds = array<i64: 1, 16, 16, 4>}, {pipeline_mode = #tpu.pipeline_mode<synchronous>, transform_indices = @transform_1, window_bounds = array<i64: 36, 16>}, {pipeline_mode = #tpu.pipeline_mode<synchronous>, transform_indices = @transform_2, window_bounds = array<i64: 1, 8>}, {pipeline_mode = #tpu.pipeline_mode<synchronous>, transform_indices = @transform_3, window_bounds = array<i64: 1, 8>}, {pipeline_mode = #tpu.pipeline_mode<synchronous>, transform_indices = @transform_4, window_bounds = array<i64: 72, 8>}, {pipeline_mode = #tpu.pipeline_mode<synchronous>, transform_indices = @transform_5, window_bounds = array<i64: 1, 8>}, {pipeline_mode = #tpu.pipeline_mode<synchronous>, transform_indices = @transform_6, window_bounds = array<i64: 1, 8>}, {pipeline_mode = #tpu.pipeline_mode<synchronous>, transform_indices = @transform_7, window_bounds = array<i64: 1, 8>}, {pipeline_mode = #tpu.pipeline_mode<synchronous>, transform_indices = @transform_8, window_bounds = array<i64: 1, 8>}, {transform_indices = @transform_9, window_bounds = array<i64: 1, 8, 64>}]} {
    %cst = arith.constant 0.000000e+00 : f32
    %0 = vector.broadcast %cst : f32 to vector<1x18x4xf32>
    %c0 = arith.constant 0 : index
    %c0_0 = arith.constant 0 : index
    %c0_1 = arith.constant 0 : index
    %1 = vector.load %arg11[%c0, %c0_0, %c0_1] : memref<18x18x4xf32, #tpu.memory_space<vmem>>, vector<1x18x4xf32>
    tpu.vector_store %arg11[%c0, %c0_0, %c0_1], %0 {strides = array<i32>} : memref<18x18x4xf32, #tpu.memory_space<vmem>>, vector<1x18x4xf32>,
    %cst_2 = arith.constant 0.000000e+00 : f32
    %2 = vector.broadcast %cst_2 : f32 to vector<1x18x4xf32>
    %c17 = arith.constant 17 : index
    %c0_3 = arith.constant 0 : index
    %c0_4 = arith.constant 0 : index
    %3 = vector.load %arg11[%c17, %c0_3, %c0_4] : memref<18x18x4xf32, #tpu.memory_space<vmem>>, vector<1x18x4xf32>
    tpu.vector_store %arg11[%c17, %c0_3, %c0_4], %2 {strides = array<i32>} : memref<18x18x4xf32, #tpu.memory_space<vmem>>, vector<1x18x4xf32>,
    %cst_5 = arith.constant 0.000000e+00 : f32
    %4 = vector.broadcast %cst_5 : f32 to vector<18x1x4xf32>
    %c0_6 = arith.constant 0 : index
    %c0_7 = arith.constant 0 : index
    %c0_8 = arith.constant 0 : index
    %5 = vector.load %arg11[%c0_6, %c0_7, %c0_8] : memref<18x18x4xf32, #tpu.memory_space<vmem>>, vector<18x1x4xf32>
    tpu.vector_store %arg11[%c0_6, %c0_7, %c0_8], %4 {strides = array<i32>} : memref<18x18x4xf32, #tpu.memory_space<vmem>>, vector<18x1x4xf32>,
    %cst_9 = arith.constant 0.000000e+00 : f32
    %6 = vector.broadcast %cst_9 : f32 to vector<18x1x4xf32>
    %c0_10 = arith.constant 0 : index
    %c17_11 = arith.constant 17 : index
    %c0_12 = arith.constant 0 : index
    %7 = vector.load %arg11[%c0_10, %c17_11, %c0_12] : memref<18x18x4xf32, #tpu.memory_space<vmem>>, vector<18x1x4xf32>
    tpu.vector_store %arg11[%c0_10, %c17_11, %c0_12], %6 {strides = array<i32>} : memref<18x18x4xf32, #tpu.memory_space<vmem>>, vector<18x1x4xf32>,
    %cst_13 = arith.constant 0.000000e+00 : f32
    %8 = vector.broadcast %cst_13 : f32 to vector<1x10x8xf32>
    %c0_14 = arith.constant 0 : index
    %c0_15 = arith.constant 0 : index
    %c0_16 = arith.constant 0 : index
    %9 = vector.load %arg12[%c0_14, %c0_15, %c0_16] : memref<10x10x8xf32, #tpu.memory_space<vmem>>, vector<1x10x8xf32>
    tpu.vector_store %arg12[%c0_14, %c0_15, %c0_16], %8 {strides = array<i32>} : memref<10x10x8xf32, #tpu.memory_space<vmem>>, vector<1x10x8xf32>,
    %cst_17 = arith.constant 0.000000e+00 : f32
    %10 = vector.broadcast %cst_17 : f32 to vector<1x10x8xf32>
    %c9 = arith.constant 9 : index
    %c0_18 = arith.constant 0 : index
    %c0_19 = arith.constant 0 : index
    %11 = vector.load %arg12[%c9, %c0_18, %c0_19] : memref<10x10x8xf32, #tpu.memory_space<vmem>>, vector<1x10x8xf32>
    tpu.vector_store %arg12[%c9, %c0_18, %c0_19], %10 {strides = array<i32>} : memref<10x10x8xf32, #tpu.memory_space<vmem>>, vector<1x10x8xf32>,
    %cst_20 = arith.constant 0.000000e+00 : f32
    %12 = vector.broadcast %cst_20 : f32 to vector<10x1x8xf32>
    %c0_21 = arith.constant 0 : index
    %c0_22 = arith.constant 0 : index
    %c0_23 = arith.constant 0 : index
    %13 = vector.load %arg12[%c0_21, %c0_22, %c0_23] : memref<10x10x8xf32, #tpu.memory_space<vmem>>, vector<10x1x8xf32>
    tpu.vector_store %arg12[%c0_21, %c0_22, %c0_23], %12 {strides = array<i32>} : memref<10x10x8xf32, #tpu.memory_space<vmem>>, vector<10x1x8xf32>,
    %cst_24 = arith.constant 0.000000e+00 : f32
    %14 = vector.broadcast %cst_24 : f32 to vector<10x1x8xf32>
    %c0_25 = arith.constant 0 : index
    %c9_26 = arith.constant 9 : index
    %c0_27 = arith.constant 0 : index
    %15 = vector.load %arg12[%c0_25, %c9_26, %c0_27] : memref<10x10x8xf32, #tpu.memory_space<vmem>>, vector<10x1x8xf32>
    tpu.vector_store %arg12[%c0_25, %c9_26, %c0_27], %14 {strides = array<i32>} : memref<10x10x8xf32, #tpu.memory_space<vmem>>, vector<10x1x8xf32>,
    %c0_28 = arith.constant 0 : index
    %c0_29 = arith.constant 0 : index
    %c0_30 = arith.constant 0 : index
    %c0_31 = arith.constant 0 : index
    %16 = vector.load %arg1[%c0_28, %c0_29, %c0_30, %c0_31] : memref<1x16x16x4xf32, #tpu.memory_space<vmem>>, vector<1x16x16x4xf32>
    %17 = vector.shape_cast %16 : vector<1x16x16x4xf32> to vector<16x16x4xf32>
    %c1 = arith.constant 1 : index
    %c1_32 = arith.constant 1 : index
    %c0_33 = arith.constant 0 : index
    %18 = vector.load %arg11[%c1, %c1_32, %c0_33] : memref<18x18x4xf32, #tpu.memory_space<vmem>>, vector<16x16x4xf32>
    tpu.vector_store %arg11[%c1, %c1_32, %c0_33], %17 {strides = array<i32>} : memref<18x18x4xf32, #tpu.memory_space<vmem>>, vector<16x16x4xf32>,
    %c0_34 = arith.constant 0 : index
    %c0_35 = arith.constant 0 : index
    %c0_36 = arith.constant 0 : index
    %19 = tpu.strided_load %arg11[%c0_34, %c0_35, %c0_36] {strides = array<i32: 2, 2, 1>} : memref<18x18x4xf32, #tpu.memory_space<vmem>>, vector<8x8x4xf32>
    %20 = vector.shape_cast %19 : vector<8x8x4xf32> to vector<64x4xf32>
    %c0_37 = arith.constant 0 : index
    %c1_38 = arith.constant 1 : index
    %c0_39 = arith.constant 0 : index
    %21 = tpu.strided_load %arg11[%c0_37, %c1_38, %c0_39] {strides = array<i32: 2, 2, 1>} : memref<18x18x4xf32, #tpu.memory_space<vmem>>, vector<8x8x4xf32>
    %22 = vector.shape_cast %21 : vector<8x8x4xf32> to vector<64x4xf32>
    %c0_40 = arith.constant 0 : index
    %c2 = arith.constant 2 : index
    %c0_41 = arith.constant 0 : index
    %23 = tpu.strided_load %arg11[%c0_40, %c2, %c0_41] {strides = array<i32: 2, 2, 1>} : memref<18x18x4xf32, #tpu.memory_space<vmem>>, vector<8x8x4xf32>
    %24 = vector.shape_cast %23 : vector<8x8x4xf32> to vector<64x4xf32>
    %c1_42 = arith.constant 1 : index
    %c0_43 = arith.constant 0 : index
    %c0_44 = arith.constant 0 : index
    %25 = tpu.strided_load %arg11[%c1_42, %c0_43, %c0_44] {strides = array<i32: 2, 2, 1>} : memref<18x18x4xf32, #tpu.memory_space<vmem>>, vector<8x8x4xf32>
    %26 = vector.shape_cast %25 : vector<8x8x4xf32> to vector<64x4xf32>
    %c1_45 = arith.constant 1 : index
    %c1_46 = arith.constant 1 : index
    %c0_47 = arith.constant 0 : index
    %27 = tpu.strided_load %arg11[%c1_45, %c1_46, %c0_47] {strides = array<i32: 2, 2, 1>} : memref<18x18x4xf32, #tpu.memory_space<vmem>>, vector<8x8x4xf32>
    %28 = vector.shape_cast %27 : vector<8x8x4xf32> to vector<64x4xf32>
    %c1_48 = arith.constant 1 : index
    %c2_49 = arith.constant 2 : index
    %c0_50 = arith.constant 0 : index
    %29 = tpu.strided_load %arg11[%c1_48, %c2_49, %c0_50] {strides = array<i32: 2, 2, 1>} : memref<18x18x4xf32, #tpu.memory_space<vmem>>, vector<8x8x4xf32>
    %30 = vector.shape_cast %29 : vector<8x8x4xf32> to vector<64x4xf32>
    %c2_51 = arith.constant 2 : index
    %c0_52 = arith.constant 0 : index
    %c0_53 = arith.constant 0 : index
    %31 = tpu.strided_load %arg11[%c2_51, %c0_52, %c0_53] {strides = array<i32: 2, 2, 1>} : memref<18x18x4xf32, #tpu.memory_space<vmem>>, vector<8x8x4xf32>
    %32 = vector.shape_cast %31 : vector<8x8x4xf32> to vector<64x4xf32>
    %c2_54 = arith.constant 2 : index
    %c1_55 = arith.constant 1 : index
    %c0_56 = arith.constant 0 : index
    %33 = tpu.strided_load %arg11[%c2_54, %c1_55, %c0_56] {strides = array<i32: 2, 2, 1>} : memref<18x18x4xf32, #tpu.memory_space<vmem>>, vector<8x8x4xf32>
    %34 = vector.shape_cast %33 : vector<8x8x4xf32> to vector<64x4xf32>
    %c2_57 = arith.constant 2 : index
    %c2_58 = arith.constant 2 : index
    %c0_59 = arith.constant 0 : index
    %35 = tpu.strided_load %arg11[%c2_57, %c2_58, %c0_59] {strides = array<i32: 2, 2, 1>} : memref<18x18x4xf32, #tpu.memory_space<vmem>>, vector<8x8x4xf32>
    %36 = vector.shape_cast %35 : vector<8x8x4xf32> to vector<64x4xf32>
    %37 = tpu.concatenate %20, %22, %24, %26, %28, %30, %32, %34, %36 in 1 : vector<64x4xf32>, vector<64x4xf32>, vector<64x4xf32>, vector<64x4xf32>, vector<64x4xf32>, vector<64x4xf32>, vector<64x4xf32>, vector<64x4xf32>, vector<64x4xf32> -> vector<64x36xf32>
    %c0_60 = arith.constant 0 : index
    %c0_61 = arith.constant 0 : index
    %38 = vector.load %arg2[%c0_60, %c0_61] : memref<36x16xf32, #tpu.memory_space<vmem>>, vector<36x16xf32>
    %cst_62 = arith.constant dense<0.000000e+00> : vector<64x16xf32>
    %39 = tpu.matmul %37, %38, %cst_62 {dimension_numbers = #tpu.dot_dimension_numbers<[1], [0], [0], [1], [0, 0, 1, 1], [], []>} : vector<64x36xf32>, vector<36x16xf32>, vector<64x16xf32> -> vector<64x16xf32>
    %40 = vector.extract_strided_slice %39 {offsets = [0, 0], sizes = [64, 8], strides = [1, 1]} : vector<64x16xf32> to vector<64x8xf32>
    %c0_63 = arith.constant 0 : index
    %c0_64 = arith.constant 0 : index
    %41 = vector.load %arg3[%c0_63, %c0_64] : memref<1x8xf32, #tpu.memory_space<vmem>>, vector<1x8xf32>
    %42 = vector.broadcast %41 : vector<1x8xf32> to vector<64x8xf32>
    %43 = arith.mulf %40, %42 : vector<64x8xf32>
    %c0_65 = arith.constant 0 : index
    %c0_66 = arith.constant 0 : index
    %44 = vector.load %arg4[%c0_65, %c0_66] : memref<1x8xf32, #tpu.memory_space<vmem>>, vector<1x8xf32>
    %45 = vector.broadcast %44 : vector<1x8xf32> to vector<64x8xf32>
    %46 = arith.addf %43, %45 : vector<64x8xf32>
    %cst_67 = arith.constant 0.000000e+00 : f32
    %47 = vector.broadcast %cst_67 : f32 to vector<64x8xf32>
    %48 = arith.maximumf %46, %47 : vector<64x8xf32>
    %49 = vector.shape_cast %48 : vector<64x8xf32> to vector<8x8x8xf32>
    %c1_68 = arith.constant 1 : index
    %c1_69 = arith.constant 1 : index
    %c0_70 = arith.constant 0 : index
    %50 = vector.load %arg12[%c1_68, %c1_69, %c0_70] : memref<10x10x8xf32, #tpu.memory_space<vmem>>, vector<8x8x8xf32>
    tpu.vector_store %arg12[%c1_68, %c1_69, %c0_70], %49 {strides = array<i32>} : memref<10x10x8xf32, #tpu.memory_space<vmem>>, vector<8x8x8xf32>,
    %51 = vector.extract_strided_slice %39 {offsets = [0, 8], sizes = [64, 8], strides = [1, 1]} : vector<64x16xf32> to vector<64x8xf32>
    %c0_71 = arith.constant 0 : index
    %c0_72 = arith.constant 0 : index
    %52 = vector.load %arg8[%c0_71, %c0_72] : memref<1x8xf32, #tpu.memory_space<vmem>>, vector<1x8xf32>
    %53 = vector.broadcast %52 : vector<1x8xf32> to vector<64x8xf32>
    %54 = arith.mulf %51, %53 : vector<64x8xf32>
    %c0_73 = arith.constant 0 : index
    %c0_74 = arith.constant 0 : index
    %55 = vector.load %arg9[%c0_73, %c0_74] : memref<1x8xf32, #tpu.memory_space<vmem>>, vector<1x8xf32>
    %56 = vector.broadcast %55 : vector<1x8xf32> to vector<64x8xf32>
    %57 = arith.addf %54, %56 : vector<64x8xf32>
    %c0_75 = arith.constant 0 : index
    %c0_76 = arith.constant 0 : index
    %c0_77 = arith.constant 0 : index
    %58 = vector.load %arg12[%c0_75, %c0_76, %c0_77] : memref<10x10x8xf32, #tpu.memory_space<vmem>>, vector<8x8x8xf32>
    %59 = vector.shape_cast %58 : vector<8x8x8xf32> to vector<64x8xf32>
    %c0_78 = arith.constant 0 : index
    %c1_79 = arith.constant 1 : index
    %c0_80 = arith.constant 0 : index
    %60 = vector.load %arg12[%c0_78, %c1_79, %c0_80] : memref<10x10x8xf32, #tpu.memory_space<vmem>>, vector<8x8x8xf32>
    %61 = vector.shape_cast %60 : vector<8x8x8xf32> to vector<64x8xf32>
    %c0_81 = arith.constant 0 : index
    %c2_82 = arith.constant 2 : index
    %c0_83 = arith.constant 0 : index
    %62 = vector.load %arg12[%c0_81, %c2_82, %c0_83] : memref<10x10x8xf32, #tpu.memory_space<vmem>>, vector<8x8x8xf32>
    %63 = vector.shape_cast %62 : vector<8x8x8xf32> to vector<64x8xf32>
    %c1_84 = arith.constant 1 : index
    %c0_85 = arith.constant 0 : index
    %c0_86 = arith.constant 0 : index
    %64 = vector.load %arg12[%c1_84, %c0_85, %c0_86] : memref<10x10x8xf32, #tpu.memory_space<vmem>>, vector<8x8x8xf32>
    %65 = vector.shape_cast %64 : vector<8x8x8xf32> to vector<64x8xf32>
    %c1_87 = arith.constant 1 : index
    %c1_88 = arith.constant 1 : index
    %c0_89 = arith.constant 0 : index
    %66 = vector.load %arg12[%c1_87, %c1_88, %c0_89] : memref<10x10x8xf32, #tpu.memory_space<vmem>>, vector<8x8x8xf32>
    %67 = vector.shape_cast %66 : vector<8x8x8xf32> to vector<64x8xf32>
    %c1_90 = arith.constant 1 : index
    %c2_91 = arith.constant 2 : index
    %c0_92 = arith.constant 0 : index
    %68 = vector.load %arg12[%c1_90, %c2_91, %c0_92] : memref<10x10x8xf32, #tpu.memory_space<vmem>>, vector<8x8x8xf32>
    %69 = vector.shape_cast %68 : vector<8x8x8xf32> to vector<64x8xf32>
    %c2_93 = arith.constant 2 : index
    %c0_94 = arith.constant 0 : index
    %c0_95 = arith.constant 0 : index
    %70 = vector.load %arg12[%c2_93, %c0_94, %c0_95] : memref<10x10x8xf32, #tpu.memory_space<vmem>>, vector<8x8x8xf32>
    %71 = vector.shape_cast %70 : vector<8x8x8xf32> to vector<64x8xf32>
    %c2_96 = arith.constant 2 : index
    %c1_97 = arith.constant 1 : index
    %c0_98 = arith.constant 0 : index
    %72 = vector.load %arg12[%c2_96, %c1_97, %c0_98] : memref<10x10x8xf32, #tpu.memory_space<vmem>>, vector<8x8x8xf32>
    %73 = vector.shape_cast %72 : vector<8x8x8xf32> to vector<64x8xf32>
    %c2_99 = arith.constant 2 : index
    %c2_100 = arith.constant 2 : index
    %c0_101 = arith.constant 0 : index
    %74 = vector.load %arg12[%c2_99, %c2_100, %c0_101] : memref<10x10x8xf32, #tpu.memory_space<vmem>>, vector<8x8x8xf32>
    %75 = vector.shape_cast %74 : vector<8x8x8xf32> to vector<64x8xf32>
    %76 = tpu.concatenate %59, %61, %63, %65, %67, %69, %71, %73, %75 in 1 : vector<64x8xf32>, vector<64x8xf32>, vector<64x8xf32>, vector<64x8xf32>, vector<64x8xf32>, vector<64x8xf32>, vector<64x8xf32>, vector<64x8xf32>, vector<64x8xf32> -> vector<64x72xf32>
    %c0_102 = arith.constant 0 : index
    %c0_103 = arith.constant 0 : index
    %77 = vector.load %arg5[%c0_102, %c0_103] : memref<72x8xf32, #tpu.memory_space<vmem>>, vector<72x8xf32>
    %cst_104 = arith.constant dense<0.000000e+00> : vector<64x8xf32>
    %78 = tpu.matmul %76, %77, %cst_104 {dimension_numbers = #tpu.dot_dimension_numbers<[1], [0], [0], [1], [0, 0, 1, 1], [], []>} : vector<64x72xf32>, vector<72x8xf32>, vector<64x8xf32> -> vector<64x8xf32>
    %c0_105 = arith.constant 0 : index
    %c0_106 = arith.constant 0 : index
    %79 = vector.load %arg6[%c0_105, %c0_106] : memref<1x8xf32, #tpu.memory_space<vmem>>, vector<1x8xf32>
    %80 = vector.broadcast %79 : vector<1x8xf32> to vector<64x8xf32>
    %81 = arith.mulf %78, %80 : vector<64x8xf32>
    %c0_107 = arith.constant 0 : index
    %c0_108 = arith.constant 0 : index
    %82 = vector.load %arg7[%c0_107, %c0_108] : memref<1x8xf32, #tpu.memory_space<vmem>>, vector<1x8xf32>
    %83 = vector.broadcast %82 : vector<1x8xf32> to vector<64x8xf32>
    %84 = arith.addf %81, %83 : vector<64x8xf32>
    %85 = arith.addf %84, %57 : vector<64x8xf32>
    %cst_109 = arith.constant 0.000000e+00 : f32
    %86 = vector.broadcast %cst_109 : f32 to vector<64x8xf32>
    %87 = arith.maximumf %85, %86 : vector<64x8xf32>
    %88 = tpu.transpose %87, [1, 0] : vector<64x8xf32> -> vector<8x64xf32>
    %c0_110 = arith.constant 0 : index
    %c0_111 = arith.constant 0 : index
    %c0_112 = arith.constant 0 : index
    %89 = vector.load %arg10[%c0_110, %c0_111, %c0_112] : memref<1x8x64xf32, #tpu.memory_space<vmem>>, vector<1x8x64xf32>
    %90 = vector.shape_cast %89 : vector<1x8x64xf32> to vector<8x64xf32>
    %91 = vector.shape_cast %88 : vector<8x64xf32> to vector<1x8x64xf32>
    tpu.vector_store %arg10[%c0_110, %c0_111, %c0_112], %91 {strides = array<i32>} : memref<1x8x64xf32, #tpu.memory_space<vmem>>, vector<1x8x64xf32>,
    return
  }
  func.func @transform_0(%arg0: i32) -> (i32, i32, i32, i32) {
    %c0_i32 = arith.constant 0 : i32
    %c0_i32_0 = arith.constant 0 : i32
    %c0_i32_1 = arith.constant 0 : i32
    %c0_i32_2 = arith.constant 0 : i32
    return %arg0, %c0_i32, %c0_i32_0, %c0_i32_1 : i32, i32, i32, i32
  }
  func.func @transform_1(%arg0: i32) -> (i32, i32) {
    %c0_i32 = arith.constant 0 : i32
    %c0_i32_0 = arith.constant 0 : i32
    %c0_i32_1 = arith.constant 0 : i32
    return %c0_i32, %c0_i32_0 : i32, i32
  }
  func.func @transform_2(%arg0: i32) -> (i32, i32) {
    %c0_i32 = arith.constant 0 : i32
    %c0_i32_0 = arith.constant 0 : i32
    %c0_i32_1 = arith.constant 0 : i32
    return %c0_i32, %c0_i32_0 : i32, i32
  }
  func.func @transform_3(%arg0: i32) -> (i32, i32) {
    %c0_i32 = arith.constant 0 : i32
    %c0_i32_0 = arith.constant 0 : i32
    %c0_i32_1 = arith.constant 0 : i32
    return %c0_i32, %c0_i32_0 : i32, i32
  }
  func.func @transform_4(%arg0: i32) -> (i32, i32) {
    %c0_i32 = arith.constant 0 : i32
    %c0_i32_0 = arith.constant 0 : i32
    %c0_i32_1 = arith.constant 0 : i32
    return %c0_i32, %c0_i32_0 : i32, i32
  }
  func.func @transform_5(%arg0: i32) -> (i32, i32) {
    %c0_i32 = arith.constant 0 : i32
    %c0_i32_0 = arith.constant 0 : i32
    %c0_i32_1 = arith.constant 0 : i32
    return %c0_i32, %c0_i32_0 : i32, i32
  }
  func.func @transform_6(%arg0: i32) -> (i32, i32) {
    %c0_i32 = arith.constant 0 : i32
    %c0_i32_0 = arith.constant 0 : i32
    %c0_i32_1 = arith.constant 0 : i32
    return %c0_i32, %c0_i32_0 : i32, i32
  }
  func.func @transform_7(%arg0: i32) -> (i32, i32) {
    %c0_i32 = arith.constant 0 : i32
    %c0_i32_0 = arith.constant 0 : i32
    %c0_i32_1 = arith.constant 0 : i32
    return %c0_i32, %c0_i32_0 : i32, i32
  }
  func.func @transform_8(%arg0: i32) -> (i32, i32) {
    %c0_i32 = arith.constant 0 : i32
    %c0_i32_0 = arith.constant 0 : i32
    %c0_i32_1 = arith.constant 0 : i32
    return %c0_i32, %c0_i32_0 : i32, i32
  }
  func.func @transform_9(%arg0: i32) -> (i32, i32, i32) {
    %c0_i32 = arith.constant 0 : i32
    %c0_i32_0 = arith.constant 0 : i32
    %c0_i32_1 = arith.constant 0 : i32
    return %arg0, %c0_i32, %c0_i32_0 : i32, i32, i32
  }
}

</mosaic_0001>

<llo_original>
// kernel: tpu_custom_call.1
$region0: #{tpu_custom_call.1}
  #allocation0 [shape = 'u32[]', space=smem, size = 0x4, offset = 0x4, fixed_abs, tag = 'smem constant byte address 0x4 - core index']
  #allocation1 [shape = 'u32[144,128]{1,0:T(1,128)}', space=vmem, size = 0x12000, scoped, tag = 'internal scratch']
  #allocation2 [shape = 'f32[18,18,4]{2,1,0:T(8,128)}', space=vmem, size = 0x36000, scoped, tag = 'scratch operand']
  #allocation3 [shape = 'f32[10,10,8]{2,1,0:T(8,128)}', space=vmem, size = 0x14000, scoped, tag = 'scratch operand']
  %s0 = inlined_call_operand.vmem [shape: f32[2,16,16,4], index: 0, kind: input, shape index: {}]
  %s1 = inlined_call_operand.vmem [shape: f32[36,16], index: 1, kind: input, shape index: {}]
  %s2 = inlined_call_operand.vmem [shape: f32[1,8], index: 2, kind: input, shape index: {}]
  %s3 = inlined_call_operand.vmem [shape: f32[1,8], index: 3, kind: input, shape index: {}]
  %s4 = inlined_call_operand.vmem [shape: f32[72,8], index: 4, kind: input, shape index: {}]
  %s5 = inlined_call_operand.vmem [shape: f32[1,8], index: 5, kind: input, shape index: {}]
  %s6 = inlined_call_operand.vmem [shape: f32[1,8], index: 6, kind: input, shape index: {}]
  %s7 = inlined_call_operand.vmem [shape: f32[1,8], index: 7, kind: input, shape index: {}]
  %s8 = inlined_call_operand.vmem [shape: f32[1,8], index: 8, kind: input, shape index: {}]
  %s9 = inlined_call_operand.hbm [shape: f32[2,8,64], index: 9, kind: output, shape index: {}]
  %s10 = sld [smem:[#allocation0]]
  $region69: #{tpu_custom_call.1} parent=0
    _
  %s12 = ssub.s32 1, %s10
  %s13 = scalar_select 0, %s12, %s10
  $region1: #{tpu_custom_call.1} parent=0
    #allocation4 [shape = 'u8[8192]{0}', space=vmem, size = 0x2000, scoped, tag = 'output window, operand 0']
    #allocation5 [shape = 's32[2]{0}', space=sflag, size = 0x8, scoped, tag = 'scoped memory for tpu_custom_call.1']
    %14 = vsyncpa [#allocation5], 0
    %s15 = scalar_lea.sflag [#allocation5], 1
    %16 = vsyncpa %s15, 0
    loop: start=0, step=1, limit=4
    $region2: #{tpu_custom_call.1} parent=1 // loop_pre_header
      _
    $region3: #{tpu_custom_call.1} parent=1 // loop_header
      %s18 = sphi 0, %s22
      %p19 = scmp.ge.s32.totalorder %s18, 4
      %s28 = sphi 0, %s30
      %s31 = sphi 0, %s28
      %s32 = sphi 0, %s31
      %s48 = sphi 0, %s32
      %s52 = sphi 0, %s52
      %s54 = sphi 0, %s52
      %s55 = sphi 0, %s54
      %s69 = sphi 0, %s55
      %s73 = sphi 0, %s73
      %s75 = sphi 0, %s73
      %s76 = sphi 0, %s75
      %s90 = sphi 0, %s76
      %s94 = sphi 0, %s94
      %s96 = sphi 0, %s94
      %s97 = sphi 0, %s96
      %s111 = sphi 0, %s97
      %s115 = sphi 0, %s115
      %s117 = sphi 0, %s115
      %s118 = sphi 0, %s117
      %s132 = sphi 0, %s118
      %s136 = sphi 0, %s136
      %s138 = sphi 0, %s136
      %s139 = sphi 0, %s138
      %s153 = sphi 0, %s139
      %s157 = sphi 0, %s157
      %s159 = sphi 0, %s157
      %s160 = sphi 0, %s159
      %s174 = sphi 0, %s160
      %s178 = sphi 0, %s178
      %s180 = sphi 0, %s178
      %s181 = sphi 0, %s180
      %s195 = sphi 0, %s181
      %s199 = sphi 0, %s199
      %s201 = sphi 0, %s199
      %s202 = sphi 0, %s201
      %s216 = sphi 0, %s202
      %s222 = sphi 0, %s224
      %s225 = sphi 0, %s222
      %s226 = sphi 0, %s225
      %s242 = sphi 0, %s226
    $region4: #{tpu_custom_call.1} parent=1 // loop_header_branch
      %21 = sbr.rel (%p19) target = $region8
    $region5: #{tpu_custom_call.1} parent=1 // loop_body
      %s23 = ssub.s32 %s18, 1
      %s24 = ssub.s32 %s18, 2
      %s25 = sadd.s32 %s18, 1
      %s26 = ssub.s32 %s18, %s25
      %p27 = scmp.eq.s32.totalorder %s26, 0
      %s29 = sadd.s32 %s28, 1
      %s30 = scalar_select %p27, %s28, %s29
      %p33 = pneg %p27
      %p34 = scmp.eq.s32.totalorder %s18, 1
      %p35 = por %p33, %p34
      %p36 = scmp.ne.s32.totalorder %s28, %s31
      %p37 = scmp.eq.s32.totalorder %s18, 0
      %p38 = por %p36, %p37
      %p39 = scmp.ne.s32.totalorder %s28, %s31
      %p40 = scmp.eq.s32.totalorder %s23, 1
      %p41 = por %p39, %p40
      %p42 = scmp.ne.s32.totalorder %s31, %s32
      %p43 = scmp.eq.s32.totalorder %s23, 0
      %p44 = por %p42, %p43
      %p45 = scmp.ne.s32.totalorder %s31, %s32
      %p46 = scmp.eq.s32.totalorder %s24, 1
      %p47 = por %p45, %p46
      %p49 = scmp.ne.s32.totalorder %s32, %s48
      %p50 = scmp.eq.s32.totalorder %s24, 0
      %p51 = por %p49, %p50
      %s53 = sadd.s32 %s52, 1
      %p56 = scmp.eq.s32.totalorder %s18, 1
      %p57 = scmp.ne.s32.totalorder %s52, %s54
      %p58 = scmp.eq.s32.totalorder %s18, 0
      %p59 = por %p57, %p58
      %p60 = scmp.ne.s32.totalorder %s52, %s54
      %p61 = scmp.eq.s32.totalorder %s23, 1
      %p62 = por %p60, %p61
      %p63 = scmp.ne.s32.totalorder %s54, %s55
      %p64 = scmp.eq.s32.totalorder %s23, 0
      %p65 = por %p63, %p64
      %p66 = scmp.ne.s32.totalorder %s54, %s55
      %p67 = scmp.eq.s32.totalorder %s24, 1
      %p68 = por %p66, %p67
      %p70 = scmp.ne.s32.totalorder %s55, %s69
      %p71 = scmp.eq.s32.totalorder %s24, 0
      %p72 = por %p70, %p71
      %s74 = sadd.s32 %s73, 1
      %p77 = scmp.eq.s32.totalorder %s18, 1
      %p78 = scmp.ne.s32.totalorder %s73, %s75
      %p79 = scmp.eq.s32.totalorder %s18, 0
      %p80 = por %p78, %p79
      %p81 = scmp.ne.s32.totalorder %s73, %s75
      %p82 = scmp.eq.s32.totalorder %s23, 1
      %p83 = por %p81, %p82
      %p84 = scmp.ne.s32.totalorder %s75, %s76
      %p85 = scmp.eq.s32.totalorder %s23, 0
      %p86 = por %p84, %p85
      %p87 = scmp.ne.s32.totalorder %s75, %s76
      %p88 = scmp.eq.s32.totalorder %s24, 1
      %p89 = por %p87, %p88
      %p91 = scmp.ne.s32.totalorder %s76, %s90
      %p92 = scmp.eq.s32.totalorder %s24, 0
      %p93 = por %p91, %p92
      %s95 = sadd.s32 %s94, 1
      %p98 = scmp.eq.s32.totalorder %s18, 1
      %p99 = scmp.ne.s32.totalorder %s94, %s96
      %p100 = scmp.eq.s32.totalorder %s18, 0
      %p101 = por %p99, %p100
      %p102 = scmp.ne.s32.totalorder %s94, %s96
      %p103 = scmp.eq.s32.totalorder %s23, 1
      %p104 = por %p102, %p103
      %p105 = scmp.ne.s32.totalorder %s96, %s97
      %p106 = scmp.eq.s32.totalorder %s23, 0
      %p107 = por %p105, %p106
      %p108 = scmp.ne.s32.totalorder %s96, %s97
      %p109 = scmp.eq.s32.totalorder %s24, 1
      %p110 = por %p108, %p109
      %p112 = scmp.ne.s32.totalorder %s97, %s111
      %p113 = scmp.eq.s32.totalorder %s24, 0
      %p114 = por %p112, %p113
      %s116 = sadd.s32 %s115, 1
      %p119 = scmp.eq.s32.totalorder %s18, 1
      %p120 = scmp.ne.s32.totalorder %s115, %s117
      %p121 = scmp.eq.s32.totalorder %s18, 0
      %p122 = por %p120, %p121
      %p123 = scmp.ne.s32.totalorder %s115, %s117
      %p124 = scmp.eq.s32.totalorder %s23, 1
      %p125 = por %p123, %p124
      %p126 = scmp.ne.s32.totalorder %s117, %s118
      %p127 = scmp.eq.s32.totalorder %s23, 0
      %p128 = por %p126, %p127
      %p129 = scmp.ne.s32.totalorder %s117, %s118
      %p130 = scmp.eq.s32.totalorder %s24, 1
      %p131 = por %p129, %p130
      %p133 = scmp.ne.s32.totalorder %s118, %s132
      %p134 = scmp.eq.s32.totalorder %s24, 0
      %p135 = por %p133, %p134
      %s137 = sadd.s32 %s136, 1
      %p140 = scmp.eq.s32.totalorder %s18, 1
      %p141 = scmp.ne.s32.totalorder %s136, %s138
      %p142 = scmp.eq.s32.totalorder %s18, 0
      %p143 = por %p141, %p142
      %p144 = scmp.ne.s32.totalorder %s136, %s138
      %p145 = scmp.eq.s32.totalorder %s23, 1
      %p146 = por %p144, %p145
      %p147 = scmp.ne.s32.totalorder %s138, %s139
      %p148 = scmp.eq.s32.totalorder %s23, 0
      %p149 = por %p147, %p148
      %p150 = scmp.ne.s32.totalorder %s138, %s139
      %p151 = scmp.eq.s32.totalorder %s24, 1
      %p152 = por %p150, %p151
      %p154 = scmp.ne.s32.totalorder %s139, %s153
      %p155 = scmp.eq.s32.totalorder %s24, 0
      %p156 = por %p154, %p155
      %s158 = sadd.s32 %s157, 1
      %p161 = scmp.eq.s32.totalorder %s18, 1
      %p162 = scmp.ne.s32.totalorder %s157, %s159
      %p163 = scmp.eq.s32.totalorder %s18, 0
      %p164 = por %p162, %p163
      %p165 = scmp.ne.s32.totalorder %s157, %s159
      %p166 = scmp.eq.s32.totalorder %s23, 1
      %p167 = por %p165, %p166
      %p168 = scmp.ne.s32.totalorder %s159, %s160
      %p169 = scmp.eq.s32.totalorder %s23, 0
      %p170 = por %p168, %p169
      %p171 = scmp.ne.s32.totalorder %s159, %s160
      %p172 = scmp.eq.s32.totalorder %s24, 1
      %p173 = por %p171, %p172
      %p175 = scmp.ne.s32.totalorder %s160, %s174
      %p176 = scmp.eq.s32.totalorder %s24, 0
      %p177 = por %p175, %p176
      %s179 = sadd.s32 %s178, 1
      %p182 = scmp.eq.s32.totalorder %s18, 1
      %p183 = scmp.ne.s32.totalorder %s178, %s180
      %p184 = scmp.eq.s32.totalorder %s18, 0
      %p185 = por %p183, %p184
      %p186 = scmp.ne.s32.totalorder %s178, %s180
      %p187 = scmp.eq.s32.totalorder %s23, 1
      %p188 = por %p186, %p187
      %p189 = scmp.ne.s32.totalorder %s180, %s181
      %p190 = scmp.eq.s32.totalorder %s23, 0
      %p191 = por %p189, %p190
      %p192 = scmp.ne.s32.totalorder %s180, %s181
      %p193 = scmp.eq.s32.totalorder %s24, 1
      %p194 = por %p192, %p193
      %p196 = scmp.ne.s32.totalorder %s181, %s195
      %p197 = scmp.eq.s32.totalorder %s24, 0
      %p198 = por %p196, %p197
      %s200 = sadd.s32 %s199, 1
      %p203 = scmp.eq.s32.totalorder %s18, 1
      %p204 = scmp.ne.s32.totalorder %s199, %s201
      %p205 = scmp.eq.s32.totalorder %s18, 0
      %p206 = por %p204, %p205
      %p207 = scmp.ne.s32.totalorder %s199, %s201
      %p208 = scmp.eq.s32.totalorder %s23, 1
      %p209 = por %p207, %p208
      %p210 = scmp.ne.s32.totalorder %s201, %s202
      %p211 = scmp.eq.s32.totalorder %s23, 0
      %p212 = por %p210, %p211
      %p213 = scmp.ne.s32.totalorder %s201, %s202
      %p214 = scmp.eq.s32.totalorder %s24, 1
      %p215 = por %p213, %p214
      %p217 = scmp.ne.s32.totalorder %s202, %s216
      %p218 = scmp.eq.s32.totalorder %s24, 0
      %p219 = por %p217, %p218
      %s220 = ssub.s32 %s18, %s25
      %p221 = scmp.eq.s32.totalorder %s220, 0
      %s223 = sadd.s32 %s222, 1
      %s224 = scalar_select %p221, %s222, %s223
      %p227 = pneg %p221
      %p228 = scmp.eq.s32.totalorder %s18, 1
      %p229 = por %p227, %p228
      %p230 = scmp.ne.s32.totalorder %s222, %s225
      %p231 = scmp.eq.s32.totalorder %s18, 0
      %p232 = por %p230, %p231
      %p233 = scmp.ne.s32.totalorder %s222, %s225
      %p234 = scmp.eq.s32.totalorder %s23, 1
      %p235 = por %p233, %p234
      %p236 = scmp.ne.s32.totalorder %s225, %s226
      %p237 = scmp.eq.s32.totalorder %s23, 0
      %p238 = por %p236, %p237
      %p239 = scmp.ne.s32.totalorder %s225, %s226
      %p240 = scmp.eq.s32.totalorder %s24, 1
      %p241 = por %p239, %p240
      %p243 = scmp.ne.s32.totalorder %s226, %s242
      %p244 = scmp.eq.s32.totalorder %s24, 0
      %p245 = por %p243, %p244
      %p246 = scmp.le.s32.totalorder 1, %s18
      %p247 = scmp.lt.s32.totalorder %s18, 3
      %p248 = pnand %p246, %p247
      %p249 = pneg %p248
      // Predicated region
      $region9: #{tpu_custom_call.1} parent=5 // pred_check
        _
      $region10: #{tpu_custom_call.1} parent=5 // pred_check_branch
        %251 = sbr.rel (%p248) target = $region12
      $region11: #{tpu_custom_call.1} parent=5 // pred_region
        %s252 = ssub.s32 %s18, 1
        // Predicated region
        $region13: #{tpu_custom_call.1} parent=11 // pred_check
          %p253 = pneg %p65
        $region14: #{tpu_custom_call.1} parent=11 // pred_check_branch
          %255 = sbr.rel (%p253) target = $region16
        $region15: #{tpu_custom_call.1} parent=11 // pred_region
          _
        $region16: #{tpu_custom_call.1} parent=11 // pred_fallthru
          _
        // Predicated region
        $region17: #{tpu_custom_call.1} parent=11 // pred_check
          %p256 = pneg %p86
        $region18: #{tpu_custom_call.1} parent=11 // pred_check_branch
          %258 = sbr.rel (%p256) target = $region20
        $region19: #{tpu_custom_call.1} parent=11 // pred_region
          _
        $region20: #{tpu_custom_call.1} parent=11 // pred_fallthru
          _
        // Predicated region
        $region21: #{tpu_custom_call.1} parent=11 // pred_check
          %p259 = pneg %p107
        $region22: #{tpu_custom_call.1} parent=11 // pred_check_branch
          %261 = sbr.rel (%p259) target = $region24
        $region23: #{tpu_custom_call.1} parent=11 // pred_region
          _
        $region24: #{tpu_custom_call.1} parent=11 // pred_fallthru
          _
        // Predicated region
        $region25: #{tpu_custom_call.1} parent=11 // pred_check
          %p262 = pneg %p128
        $region26: #{tpu_custom_call.1} parent=11 // pred_check_branch
          %264 = sbr.rel (%p262) target = $region28
        $region27: #{tpu_custom_call.1} parent=11 // pred_region
          _
        $region28: #{tpu_custom_call.1} parent=11 // pred_fallthru
          _
        // Predicated region
        $region29: #{tpu_custom_call.1} parent=11 // pred_check
          %p265 = pneg %p149
        $region30: #{tpu_custom_call.1} parent=11 // pred_check_branch
          %267 = sbr.rel (%p265) target = $region32
        $region31: #{tpu_custom_call.1} parent=11 // pred_region
          _
        $region32: #{tpu_custom_call.1} parent=11 // pred_fallthru
          _
        // Predicated region
        $region33: #{tpu_custom_call.1} parent=11 // pred_check
          %p268 = pneg %p170
        $region34: #{tpu_custom_call.1} parent=11 // pred_check_branch
          %270 = sbr.rel (%p268) target = $region36
        $region35: #{tpu_custom_call.1} parent=11 // pred_region
          _
        $region36: #{tpu_custom_call.1} parent=11 // pred_fallthru
          _
        // Predicated region
        $region37: #{tpu_custom_call.1} parent=11 // pred_check
          %p271 = pneg %p191
        $region38: #{tpu_custom_call.1} parent=11 // pred_check_branch
          %273 = sbr.rel (%p271) target = $region40
        $region39: #{tpu_custom_call.1} parent=11 // pred_region
          _
        $region40: #{tpu_custom_call.1} parent=11 // pred_fallthru
          _
        // Predicated region
        $region41: #{tpu_custom_call.1} parent=11 // pred_check
          %p274 = pneg %p212
        $region42: #{tpu_custom_call.1} parent=11 // pred_check_branch
          %276 = sbr.rel (%p274) target = $region44
        $region43: #{tpu_custom_call.1} parent=11 // pred_region
          _
        $region44: #{tpu_custom_call.1} parent=11 // pred_fallthru
          _
      $region12: #{tpu_custom_call.1} parent=5 // pred_fallthru
        _
      %p277 = scmp.lt.s32.totalorder %s18, 2
      // Predicated region
      $region45: #{tpu_custom_call.1} parent=5 // pred_check
        %p278 = pneg %p277
      $region46: #{tpu_custom_call.1} parent=5 // pred_check_branch
        %280 = sbr.rel (%p278) target = $region48
      $region47: #{tpu_custom_call.1} parent=5 // pred_region
        // Predicated region
        $region49: #{tpu_custom_call.1} parent=47 // pred_check
          %p281 = pneg %p38
        $region50: #{tpu_custom_call.1} parent=47 // pred_check_branch
          %283 = sbr.rel (%p281) target = $region52
        $region51: #{tpu_custom_call.1} parent=47 // pred_region
          %p284 = scmp.lt.s32.totalorder %s18, 1
          %s285 = scalar_select %p284, %s18, 1
          %s286 = smul.addr %s285, 32
          %s287 = smul.addr %s286, 8
          %s288 = scalar_lea.vmem %s0, %s287
        $region52: #{tpu_custom_call.1} parent=47 // pred_fallthru
          _
      $region48: #{tpu_custom_call.1} parent=5 // pred_fallthru
        _
      %p289 = scmp.le.s32.totalorder 1, %s18
      %p290 = scmp.lt.s32.totalorder %s18, 3
      %p291 = pnand %p289, %p290
      %p292 = pneg %p291
      // Predicated region
      $region53: #{tpu_custom_call.1} parent=5 // pred_check
        _
      $region54: #{tpu_custom_call.1} parent=5 // pred_check_branch
        %294 = sbr.rel (%p291) target = $region56
      $region55: #{tpu_custom_call.1} parent=5 // pred_region
        %s295 = ssub.s32 %s18, 1
        %p296 = scmp.lt.s32.totalorder %s23, 1
        %s297 = scalar_select %p296, %s23, 1
        %s298 = smul.addr %s297, 32
        %s299 = smul.addr %s298, 8
        %s300 = scalar_lea.vmem %s0, %s299
        %p301 = pneg %p44
        %p302 = pneg %p41
        %p303 = pneg %p65
        %p304 = pneg %p62
        %p305 = pneg %p86
        %p306 = pneg %p83
        %p307 = pneg %p107
        %p308 = pneg %p104
        %p309 = pneg %p128
        %p310 = pneg %p125
        %p311 = pneg %p149
        %p312 = pneg %p146
        %p313 = pneg %p170
        %p314 = pneg %p167
        %p315 = pneg %p191
        %p316 = pneg %p188
        %p317 = pneg %p212
        %p318 = pneg %p209
        %p319 = pneg %p238
        %p320 = pneg %p235
        %s321 = sand.u32 %s225, 1
        %s322 = scalar_lea.sflag [#allocation5], %s321
        %s323 = sand.u32 %s225, 1
        %s324 = smul.addr %s323, 8
        %s325 = scalar_lea.vmem [#allocation4], %s324
        %p326 = scmp.lt.s32.totalorder %s23, 1
        %s327 = scalar_select %p326, %s23, 1
        %s328 = smul.addr %s327, 32
        %s329 = smul.addr %s328, 8
        %s330 = scalar_lea.vmem %s0, %s329
        %vm331 = vcmask 31744
        %332 = vst.msk [vmem:[#allocation2] sm:$0xff] %vm331, 0.0
        %333 = vst.msk [vmem:[#allocation2 + $0x8] sm:$0xff] %vm331, 0.0
        %vm334 = vcmask 25600
        %335 = vst.msk [vmem:[#allocation2 + $0x10] sm:$0x3] %vm334, 0.0
        %s336 = scalar_lea.vmem [#allocation2], 408
        %337 = vst.msk [vmem:[%s336] sm:$0xff] %vm331, 0.0
        %338 = vst.msk [vmem:[%s336 + $0x8] sm:$0xff] %vm331, 0.0
        %339 = vst.msk [vmem:[%s336 + $0x10] sm:$0x3] %vm334, 0.0
        %vm340 = vcmask 24576
        %341 = vst.msk [vmem:[#allocation2] sm:$0x1] %vm340, 0.0
        %342 = vst.msk [vmem:[#allocation2 + $0x18] sm:$0x1] %vm340, 0.0
        %343 = vst.msk [vmem:[#allocation2 + $0x30] sm:$0x1] %vm340, 0.0
        %344 = vst.msk [vmem:[#allocation2 + $0x48] sm:$0x1] %vm340, 0.0
        %345 = vst.msk [vmem:[#allocation2 + $0x60] sm:$0x1] %vm340, 0.0
        %346 = vst.msk [vmem:[#allocation2 + $0x78] sm:$0x1] %vm340, 0.0
        %347 = vst.msk [vmem:[#allocation2 + $0x90] sm:$0x1] %vm340, 0.0
        %348 = vst.msk [vmem:[#allocation2 + $0xa8] sm:$0x1] %vm340, 0.0
        %349 = vst.msk [vmem:[#allocation2 + $0xc0] sm:$0x1] %vm340, 0.0
        %350 = vst.msk [vmem:[#allocation2 + $0xd8] sm:$0x1] %vm340, 0.0
        %351 = vst.msk [vmem:[#allocation2 + $0xf0] sm:$0x1] %vm340, 0.0
        %352 = vst.msk [vmem:[#allocation2 + $0x108] sm:$0x1] %vm340, 0.0
        %353 = vst.msk [vmem:[#allocation2 + $0x120] sm:$0x1] %vm340, 0.0
        %354 = vst.msk [vmem:[#allocation2 + $0x138] sm:$0x1] %vm340, 0.0
        %355 = vst.msk [vmem:[#allocation2 + $0x150] sm:$0x1] %vm340, 0.0
        %356 = vst.msk [vmem:[#allocation2 + $0x168] sm:$0x1] %vm340, 0.0
        %357 = vst.msk [vmem:[#allocation2 + $0x180] sm:$0x1] %vm340, 0.0
        %358 = vst.msk [vmem:[#allocation2 + $0x198] sm:$0x1] %vm340, 0.0
        %359 = vst.msk [vmem:[#allocation2 + $0x11] sm:$0x1] %vm340, 0.0
        %360 = vst.msk [vmem:[#allocation2 + $0x29] sm:$0x1] %vm340, 0.0
        %361 = vst.msk [vmem:[#allocation2 + $0x41] sm:$0x1] %vm340, 0.0
        %362 = vst.msk [vmem:[#allocation2 + $0x59] sm:$0x1] %vm340, 0.0
        %363 = vst.msk [vmem:[#allocation2 + $0x71] sm:$0x1] %vm340, 0.0
        %364 = vst.msk [vmem:[#allocation2 + $0x89] sm:$0x1] %vm340, 0.0
        %365 = vst.msk [vmem:[#allocation2 + $0xa1] sm:$0x1] %vm340, 0.0
        %366 = vst.msk [vmem:[#allocation2 + $0xb9] sm:$0x1] %vm340, 0.0
        %367 = vst.msk [vmem:[#allocation2 + $0xd1] sm:$0x1] %vm340, 0.0
        %368 = vst.msk [vmem:[#allocation2 + $0xe9] sm:$0x1] %vm340, 0.0
        %369 = vst.msk [vmem:[#allocation2 + $0x101] sm:$0x1] %vm340, 0.0
        %370 = vst.msk [vmem:[#allocation2 + $0x119] sm:$0x1] %vm340, 0.0
        %371 = vst.msk [vmem:[#allocation2 + $0x131] sm:$0x1] %vm340, 0.0
        %372 = vst.msk [vmem:[#allocation2 + $0x149] sm:$0x1] %vm340, 0.0
        %373 = vst.msk [vmem:[#allocation2 + $0x161] sm:$0x1] %vm340, 0.0
        %374 = vst.msk [vmem:[#allocation2 + $0x179] sm:$0x1] %vm340, 0.0
        %375 = vst.msk [vmem:[#allocation2 + $0x191] sm:$0x1] %vm340, 0.0
        %376 = vst.msk [vmem:[#allocation2 + $0x1a9] sm:$0x1] %vm340, 0.0
        %vm377 = vcmask 64512
        %378 = vst.msk [vmem:[#allocation3] sm:$0xff] %vm377, 0.0
        %vm379 = vcmask 58368
        %380 = vst.msk [vmem:[#allocation3 + $0x8] sm:$0x3] %vm379, 0.0
        %s381 = scalar_lea.vmem [#allocation3], 144
        %382 = vst.msk [vmem:[%s381] sm:$0xff] %vm377, 0.0
        %383 = vst.msk [vmem:[%s381 + $0x8] sm:$0x3] %vm379, 0.0
        %vm384 = vcmask 57344
        %385 = vst.msk [vmem:[#allocation3] sm:$0x1] %vm384, 0.0
        %386 = vst.msk [vmem:[#allocation3 + $0x10] sm:$0x1] %vm384, 0.0
        %387 = vst.msk [vmem:[#allocation3 + $0x20] sm:$0x1] %vm384, 0.0
        %388 = vst.msk [vmem:[#allocation3 + $0x30] sm:$0x1] %vm384, 0.0
        %389 = vst.msk [vmem:[#allocation3 + $0x40] sm:$0x1] %vm384, 0.0
        %390 = vst.msk [vmem:[#allocation3 + $0x50] sm:$0x1] %vm384, 0.0
        %391 = vst.msk [vmem:[#allocation3 + $0x60] sm:$0x1] %vm384, 0.0
        %392 = vst.msk [vmem:[#allocation3 + $0x70] sm:$0x1] %vm384, 0.0
        %393 = vst.msk [vmem:[#allocation3 + $0x80] sm:$0x1] %vm384, 0.0
        %394 = vst.msk [vmem:[#allocation3 + $0x90] sm:$0x1] %vm384, 0.0
        %395 = vst.msk [vmem:[#allocation3 + $0x9] sm:$0x1] %vm384, 0.0
        %396 = vst.msk [vmem:[#allocation3 + $0x19] sm:$0x1] %vm384, 0.0
        %397 = vst.msk [vmem:[#allocation3 + $0x29] sm:$0x1] %vm384, 0.0
        %398 = vst.msk [vmem:[#allocation3 + $0x39] sm:$0x1] %vm384, 0.0
        %399 = vst.msk [vmem:[#allocation3 + $0x49] sm:$0x1] %vm384, 0.0
        %400 = vst.msk [vmem:[#allocation3 + $0x59] sm:$0x1] %vm384, 0.0
        %401 = vst.msk [vmem:[#allocation3 + $0x69] sm:$0x1] %vm384, 0.0
        %402 = vst.msk [vmem:[#allocation3 + $0x79] sm:$0x1] %vm384, 0.0
        %403 = vst.msk [vmem:[#allocation3 + $0x89] sm:$0x1] %vm384, 0.0
        %404 = vst.msk [vmem:[#allocation3 + $0x99] sm:$0x1] %vm384, 0.0
        %v405 = vld [vmem:[%s330] sm:$0xff]
        %v406 = vld [vmem:[%s330 + $0x8] sm:$0xff]
        %v407 = vld [vmem:[%s330 + $0x10] sm:$0xff]
        %v408 = vld [vmem:[%s330 + $0x18] sm:$0xff]
        %v409 = vld [vmem:[%s330 + $0x20] sm:$0xff]
        %v410 = vld [vmem:[%s330 + $0x28] sm:$0xff]
        %v411 = vld [vmem:[%s330 + $0x30] sm:$0xff]
        %v412 = vld [vmem:[%s330 + $0x38] sm:$0xff]
        %v413 = vld [vmem:[%s330 + $0x40] sm:$0xff]
        %v414 = vld [vmem:[%s330 + $0x48] sm:$0xff]
        %v415 = vld [vmem:[%s330 + $0x50] sm:$0xff]
        %v416 = vld [vmem:[%s330 + $0x58] sm:$0xff]
        %v417 = vld [vmem:[%s330 + $0x60] sm:$0xff]
        %v418 = vld [vmem:[%s330 + $0x68] sm:$0xff]
        %v419 = vld [vmem:[%s330 + $0x70] sm:$0xff]
        %v420 = vld [vmem:[%s330 + $0x78] sm:$0xff]
        %v421 = vld [vmem:[%s330 + $0x80] sm:$0xff]
        %v422 = vld [vmem:[%s330 + $0x88] sm:$0xff]
        %v423 = vld [vmem:[%s330 + $0x90] sm:$0xff]
        %v424 = vld [vmem:[%s330 + $0x98] sm:$0xff]
        %v425 = vld [vmem:[%s330 + $0xa0] sm:$0xff]
        %v426 = vld [vmem:[%s330 + $0xa8] sm:$0xff]
        %v427 = vld [vmem:[%s330 + $0xb0] sm:$0xff]
        %v428 = vld [vmem:[%s330 + $0xb8] sm:$0xff]
        %v429 = vld [vmem:[%s330 + $0xc0] sm:$0xff]
        %v430 = vld [vmem:[%s330 + $0xc8] sm:$0xff]
        %v431 = vld [vmem:[%s330 + $0xd0] sm:$0xff]
        %v432 = vld [vmem:[%s330 + $0xd8] sm:$0xff]
        %v433 = vld [vmem:[%s330 + $0xe0] sm:$0xff]
        %v434 = vld [vmem:[%s330 + $0xe8] sm:$0xff]
        %v435 = vld [vmem:[%s330 + $0xf0] sm:$0xff]
        %v436 = vld [vmem:[%s330 + $0xf8] sm:$0xff]
        %s437 = scalar_lea.vmem [#allocation2], 24
        %438 = vst.msk [vmem:[%s437 + $0x1] sm:$0xff] %vm331, %v405
        %439 = vst.msk [vmem:[%s437 + $0x9] sm:$0xff] %vm331, %v406
        %440 = vst.msk [vmem:[%s437 + $0x19] sm:$0xff] %vm331, %v407
        %441 = vst.msk [vmem:[%s437 + $0x21] sm:$0xff] %vm331, %v408
        %442 = vst.msk [vmem:[%s437 + $0x31] sm:$0xff] %vm331, %v409
        %443 = vst.msk [vmem:[%s437 + $0x39] sm:$0xff] %vm331, %v410
        %444 = vst.msk [vmem:[%s437 + $0x49] sm:$0xff] %vm331, %v411
        %445 = vst.msk [vmem:[%s437 + $0x51] sm:$0xff] %vm331, %v412
        %446 = vst.msk [vmem:[%s437 + $0x61] sm:$0xff] %vm331, %v413
        %447 = vst.msk [vmem:[%s437 + $0x69] sm:$0xff] %vm331, %v414
        %448 = vst.msk [vmem:[%s437 + $0x79] sm:$0xff] %vm331, %v415
        %449 = vst.msk [vmem:[%s437 + $0x81] sm:$0xff] %vm331, %v416
        %450 = vst.msk [vmem:[%s437 + $0x91] sm:$0xff] %vm331, %v417
        %451 = vst.msk [vmem:[%s437 + $0x99] sm:$0xff] %vm331, %v418
        %452 = vst.msk [vmem:[%s437 + $0xa9] sm:$0xff] %vm331, %v419
        %453 = vst.msk [vmem:[%s437 + $0xb1] sm:$0xff] %vm331, %v420
        %454 = vst.msk [vmem:[%s437 + $0xc1] sm:$0xff] %vm331, %v421
        %455 = vst.msk [vmem:[%s437 + $0xc9] sm:$0xff] %vm331, %v422
        %456 = vst.msk [vmem:[%s437 + $0xd9] sm:$0xff] %vm331, %v423
        %457 = vst.msk [vmem:[%s437 + $0xe1] sm:$0xff] %vm331, %v424
        %458 = vst.msk [vmem:[%s437 + $0xf1] sm:$0xff] %vm331, %v425
        %459 = vst.msk [vmem:[%s437 + $0xf9] sm:$0xff] %vm331, %v426
        %460 = vst.msk [vmem:[%s437 + $0x109] sm:$0xff] %vm331, %v427
        %461 = vst.msk [vmem:[%s437 + $0x111] sm:$0xff] %vm331, %v428
        %462 = vst.msk [vmem:[%s437 + $0x121] sm:$0xff] %vm331, %v429
        %463 = vst.msk [vmem:[%s437 + $0x129] sm:$0xff] %vm331, %v430
        %464 = vst.msk [vmem:[%s437 + $0x139] sm:$0xff] %vm331, %v431
        %465 = vst.msk [vmem:[%s437 + $0x141] sm:$0xff] %vm331, %v432
        %466 = vst.msk [vmem:[%s437 + $0x151] sm:$0xff] %vm331, %v433
        %467 = vst.msk [vmem:[%s437 + $0x159] sm:$0xff] %vm331, %v434
        %468 = vst.msk [vmem:[%s437 + $0x169] sm:$0xff] %vm331, %v435
        %469 = vst.msk [vmem:[%s437 + $0x171] sm:$0xff] %vm331, %v436
        %v470 = vld [vmem:[#allocation2] ss:$2 sm:$0xff]
        %s471 = scalar_lea.vmem [#allocation2], 48
        %v472 = vld [vmem:[%s471] ss:$2 sm:$0xff]
        %s473 = scalar_lea.vmem [#allocation2], 96
        %v474 = vld [vmem:[%s473] ss:$2 sm:$0xff]
        %s475 = scalar_lea.vmem [#allocation2], 144
        %v476 = vld [vmem:[%s475] ss:$2 sm:$0xff]
        %s477 = scalar_lea.vmem [#allocation2], 192
        %v478 = vld [vmem:[%s477] ss:$2 sm:$0xff]
        %s479 = scalar_lea.vmem [#allocation2], 240
        %v480 = vld [vmem:[%s479] ss:$2 sm:$0xff]
        %s481 = scalar_lea.vmem [#allocation2], 288
        %v482 = vld [vmem:[%s481] ss:$2 sm:$0xff]
        %s483 = scalar_lea.vmem [#allocation2], 336
        %v484 = vld [vmem:[%s483] ss:$2 sm:$0xff]
        %s485 = scalar_lea.vmem [#allocation2], 1
        %v486 = vld [vmem:[%s485] ss:$2 sm:$0xff]
        %s487 = scalar_lea.vmem [#allocation2], 49
        %v488 = vld [vmem:[%s487] ss:$2 sm:$0xff]
        %s489 = scalar_lea.vmem [#allocation2], 97
        %v490 = vld [vmem:[%s489] ss:$2 sm:$0xff]
        %s491 = scalar_lea.vmem [#allocation2], 145
        %v492 = vld [vmem:[%s491] ss:$2 sm:$0xff]
        %s493 = scalar_lea.vmem [#allocation2], 193
        %v494 = vld [vmem:[%s493] ss:$2 sm:$0xff]
        %s495 = scalar_lea.vmem [#allocation2], 241
        %v496 = vld [vmem:[%s495] ss:$2 sm:$0xff]
        %s497 = scalar_lea.vmem [#allocation2], 289
        %v498 = vld [vmem:[%s497] ss:$2 sm:$0xff]
        %s499 = scalar_lea.vmem [#allocation2], 337
        %v500 = vld [vmem:[%s499] ss:$2 sm:$0xff]
        %s501 = scalar_lea.vmem [#allocation2], 2
        %v502 = vld [vmem:[%s501] ss:$2 sm:$0xff]
        %s503 = scalar_lea.vmem [#allocation2], 50
        %v504 = vld [vmem:[%s503] ss:$2 sm:$0xff]
        %s505 = scalar_lea.vmem [#allocation2], 98
        %v506 = vld [vmem:[%s505] ss:$2 sm:$0xff]
        %s507 = scalar_lea.vmem [#allocation2], 146
        %v508 = vld [vmem:[%s507] ss:$2 sm:$0xff]
        %s509 = scalar_lea.vmem [#allocation2], 194
        %v510 = vld [vmem:[%s509] ss:$2 sm:$0xff]
        %s511 = scalar_lea.vmem [#allocation2], 242
        %v512 = vld [vmem:[%s511] ss:$2 sm:$0xff]
        %s513 = scalar_lea.vmem [#allocation2], 290
        %v514 = vld [vmem:[%s513] ss:$2 sm:$0xff]
        %s515 = scalar_lea.vmem [#allocation2], 338
        %v516 = vld [vmem:[%s515] ss:$2 sm:$0xff]
        %v517 = vld [vmem:[%s437] ss:$2 sm:$0xff]
        %s518 = scalar_lea.vmem %s437, 48 [#allocation2]
        %v519 = vld [vmem:[%s518] ss:$2 sm:$0xff]
        %s520 = scalar_lea.vmem %s437, 96 [#allocation2]
        %v521 = vld [vmem:[%s520] ss:$2 sm:$0xff]
        %s522 = scalar_lea.vmem %s437, 144 [#allocation2]
        %v523 = vld [vmem:[%s522] ss:$2 sm:$0xff]
        %s524 = scalar_lea.vmem %s437, 192 [#allocation2]
        %v525 = vld [vmem:[%s524] ss:$2 sm:$0xff]
        %s526 = scalar_lea.vmem %s437, 240 [#allocation2]
        %v527 = vld [vmem:[%s526] ss:$2 sm:$0xff]
        %s528 = scalar_lea.vmem %s437, 288 [#allocation2]
        %v529 = vld [vmem:[%s528] ss:$2 sm:$0xff]
        %s530 = scalar_lea.vmem %s437, 336 [#allocation2]
        %v531 = vld [vmem:[%s530] ss:$2 sm:$0xff]
        %s532 = scalar_lea.vmem %s437, 1 [#allocation2]
        %v533 = vld [vmem:[%s532] ss:$2 sm:$0xff]
        %s534 = scalar_lea.vmem %s437, 49 [#allocation2]
        %v535 = vld [vmem:[%s534] ss:$2 sm:$0xff]
        %s536 = scalar_lea.vmem %s437, 97 [#allocation2]
        %v537 = vld [vmem:[%s536] ss:$2 sm:$0xff]
        %s538 = scalar_lea.vmem %s437, 145 [#allocation2]
        %v539 = vld [vmem:[%s538] ss:$2 sm:$0xff]
        %s540 = scalar_lea.vmem %s437, 193 [#allocation2]
        %v541 = vld [vmem:[%s540] ss:$2 sm:$0xff]
        %s542 = scalar_lea.vmem %s437, 241 [#allocation2]
        %v543 = vld [vmem:[%s542] ss:$2 sm:$0xff]
        %s544 = scalar_lea.vmem %s437, 289 [#allocation2]
        %v545 = vld [vmem:[%s544] ss:$2 sm:$0xff]
        %s546 = scalar_lea.vmem %s437, 337 [#allocation2]
        %v547 = vld [vmem:[%s546] ss:$2 sm:$0xff]
        %s548 = scalar_lea.vmem %s437, 2 [#allocation2]
        %v549 = vld [vmem:[%s548] ss:$2 sm:$0xff]
        %s550 = scalar_lea.vmem %s437, 50 [#allocation2]
        %v551 = vld [vmem:[%s550] ss:$2 sm:$0xff]
        %s552 = scalar_lea.vmem %s437, 98 [#allocation2]
        %v553 = vld [vmem:[%s552] ss:$2 sm:$0xff]
        %s554 = scalar_lea.vmem %s437, 146 [#allocation2]
        %v555 = vld [vmem:[%s554] ss:$2 sm:$0xff]
        %s556 = scalar_lea.vmem %s437, 194 [#allocation2]
        %v557 = vld [vmem:[%s556] ss:$2 sm:$0xff]
        %s558 = scalar_lea.vmem %s437, 242 [#allocation2]
        %v559 = vld [vmem:[%s558] ss:$2 sm:$0xff]
        %s560 = scalar_lea.vmem %s437, 290 [#allocation2]
        %v561 = vld [vmem:[%s560] ss:$2 sm:$0xff]
        %s562 = scalar_lea.vmem %s437, 338 [#allocation2]
        %v563 = vld [vmem:[%s562] ss:$2 sm:$0xff]
        %s564 = scalar_lea.vmem [#allocation2], 48
        %v565 = vld [vmem:[%s564] ss:$2 sm:$0xff]
        %s566 = scalar_lea.vmem %s564, 48 [#allocation2]
        %v567 = vld [vmem:[%s566] ss:$2 sm:$0xff]
        %s568 = scalar_lea.vmem %s564, 96 [#allocation2]
        %v569 = vld [vmem:[%s568] ss:$2 sm:$0xff]
        %s570 = scalar_lea.vmem %s564, 144 [#allocation2]
        %v571 = vld [vmem:[%s570] ss:$2 sm:$0xff]
        %s572 = scalar_lea.vmem %s564, 192 [#allocation2]
        %v573 = vld [vmem:[%s572] ss:$2 sm:$0xff]
        %s574 = scalar_lea.vmem %s564, 240 [#allocation2]
        %v575 = vld [vmem:[%s574] ss:$2 sm:$0xff]
        %s576 = scalar_lea.vmem %s564, 288 [#allocation2]
        %v577 = vld [vmem:[%s576] ss:$2 sm:$0xff]
        %s578 = scalar_lea.vmem %s564, 336 [#allocation2]
        %v579 = vld [vmem:[%s578] ss:$2 sm:$0xff]
        %s580 = scalar_lea.vmem %s564, 1 [#allocation2]
        %v581 = vld [vmem:[%s580] ss:$2 sm:$0xff]
        %s582 = scalar_lea.vmem %s564, 49 [#allocation2]
        %v583 = vld [vmem:[%s582] ss:$2 sm:$0xff]
        %s584 = scalar_lea.vmem %s564, 97 [#allocation2]
        %v585 = vld [vmem:[%s584] ss:$2 sm:$0xff]
        %s586 = scalar_lea.vmem %s564, 145 [#allocation2]
        %v587 = vld [vmem:[%s586] ss:$2 sm:$0xff]
        %s588 = scalar_lea.vmem %s564, 193 [#allocation2]
        %v589 = vld [vmem:[%s588] ss:$2 sm:$0xff]
        %s590 = scalar_lea.vmem %s564, 241 [#allocation2]
        %v591 = vld [vmem:[%s590] ss:$2 sm:$0xff]
        %s592 = scalar_lea.vmem %s564, 289 [#allocation2]
        %v593 = vld [vmem:[%s592] ss:$2 sm:$0xff]
        %s594 = scalar_lea.vmem %s564, 337 [#allocation2]
        %v595 = vld [vmem:[%s594] ss:$2 sm:$0xff]
        %s596 = scalar_lea.vmem %s564, 2 [#allocation2]
        %v597 = vld [vmem:[%s596] ss:$2 sm:$0xff]
        %s598 = scalar_lea.vmem %s564, 50 [#allocation2]
        %v599 = vld [vmem:[%s598] ss:$2 sm:$0xff]
        %s600 = scalar_lea.vmem %s564, 98 [#allocation2]
        %v601 = vld [vmem:[%s600] ss:$2 sm:$0xff]
        %s602 = scalar_lea.vmem %s564, 146 [#allocation2]
        %v603 = vld [vmem:[%s602] ss:$2 sm:$0xff]
        %s604 = scalar_lea.vmem %s564, 194 [#allocation2]
        %v605 = vld [vmem:[%s604] ss:$2 sm:$0xff]
        %s606 = scalar_lea.vmem %s564, 242 [#allocation2]
        %v607 = vld [vmem:[%s606] ss:$2 sm:$0xff]
        %s608 = scalar_lea.vmem %s564, 290 [#allocation2]
        %v609 = vld [vmem:[%s608] ss:$2 sm:$0xff]
        %s610 = scalar_lea.vmem %s564, 338 [#allocation2]
        %v611 = vld [vmem:[%s610] ss:$2 sm:$0xff]
        %620 = vrot.lane.b32.xlu0 %v486, 4
        %v621 = vpop.permute.xlu0 %620
        %622 = vrot.lane.b32.xlu0 %v488, 4
        %v623 = vpop.permute.xlu0 %622
        %624 = vrot.lane.b32.xlu0 %v490, 4
        %v625 = vpop.permute.xlu0 %624
        %626 = vrot.lane.b32.xlu0 %v492, 4
        %v627 = vpop.permute.xlu0 %626
        %628 = vrot.lane.b32.xlu0 %v494, 4
        %v629 = vpop.permute.xlu0 %628
        %630 = vrot.lane.b32.xlu0 %v496, 4
        %v631 = vpop.permute.xlu0 %630
        %632 = vrot.lane.b32.xlu0 %v498, 4
        %v633 = vpop.permute.xlu0 %632
        %634 = vrot.lane.b32.xlu0 %v500, 4
        %v635 = vpop.permute.xlu0 %634
        %652 = vrot.lane.b32.xlu0 %v502, 8
        %v653 = vpop.permute.xlu0 %652
        %654 = vrot.lane.b32.xlu0 %v504, 8
        %v655 = vpop.permute.xlu0 %654
        %656 = vrot.lane.b32.xlu0 %v506, 8
        %v657 = vpop.permute.xlu0 %656
        %658 = vrot.lane.b32.xlu0 %v508, 8
        %v659 = vpop.permute.xlu0 %658
        %660 = vrot.lane.b32.xlu0 %v510, 8
        %v661 = vpop.permute.xlu0 %660
        %662 = vrot.lane.b32.xlu0 %v512, 8
        %v663 = vpop.permute.xlu0 %662
        %664 = vrot.lane.b32.xlu0 %v514, 8
        %v665 = vpop.permute.xlu0 %664
        %666 = vrot.lane.b32.xlu0 %v516, 8
        %v667 = vpop.permute.xlu0 %666
        %684 = vrot.lane.b32.xlu0 %v517, 12
        %v685 = vpop.permute.xlu0 %684
        %686 = vrot.lane.b32.xlu0 %v519, 12
        %v687 = vpop.permute.xlu0 %686
        %688 = vrot.lane.b32.xlu0 %v521, 12
        %v689 = vpop.permute.xlu0 %688
        %690 = vrot.lane.b32.xlu0 %v523, 12
        %v691 = vpop.permute.xlu0 %690
        %692 = vrot.lane.b32.xlu0 %v525, 12
        %v693 = vpop.permute.xlu0 %692
        %694 = vrot.lane.b32.xlu0 %v527, 12
        %v695 = vpop.permute.xlu0 %694
        %696 = vrot.lane.b32.xlu0 %v529, 12
        %v697 = vpop.permute.xlu0 %696
        %698 = vrot.lane.b32.xlu0 %v531, 12
        %v699 = vpop.permute.xlu0 %698
        %716 = vrot.lane.b32.xlu0 %v533, 16
        %v717 = vpop.permute.xlu0 %716
        %718 = vrot.lane.b32.xlu0 %v535, 16
        %v719 = vpop.permute.xlu0 %718
        %720 = vrot.lane.b32.xlu0 %v537, 16
        %v721 = vpop.permute.xlu0 %720
        %722 = vrot.lane.b32.xlu0 %v539, 16
        %v723 = vpop.permute.xlu0 %722
        %724 = vrot.lane.b32.xlu0 %v541, 16
        %v725 = vpop.permute.xlu0 %724
        %726 = vrot.lane.b32.xlu0 %v543, 16
        %v727 = vpop.permute.xlu0 %726
        %728 = vrot.lane.b32.xlu0 %v545, 16
        %v729 = vpop.permute.xlu0 %728
        %730 = vrot.lane.b32.xlu0 %v547, 16
        %v731 = vpop.permute.xlu0 %730
        %748 = vrot.lane.b32.xlu0 %v549, 20
        %v749 = vpop.permute.xlu0 %748
        %750 = vrot.lane.b32.xlu0 %v551, 20
        %v751 = vpop.permute.xlu0 %750
        %752 = vrot.lane.b32.xlu0 %v553, 20
        %v753 = vpop.permute.xlu0 %752
        %754 = vrot.lane.b32.xlu0 %v555, 20
        %v755 = vpop.permute.xlu0 %754
        %756 = vrot.lane.b32.xlu0 %v557, 20
        %v757 = vpop.permute.xlu0 %756
        %758 = vrot.lane.b32.xlu0 %v559, 20
        %v759 = vpop.permute.xlu0 %758
        %760 = vrot.lane.b32.xlu0 %v561, 20
        %v761 = vpop.permute.xlu0 %760
        %762 = vrot.lane.b32.xlu0 %v563, 20
        %v763 = vpop.permute.xlu0 %762
        %780 = vrot.lane.b32.xlu0 %v565, 24
        %v781 = vpop.permute.xlu0 %780
        %782 = vrot.lane.b32.xlu0 %v567, 24
        %v783 = vpop.permute.xlu0 %782
        %784 = vrot.lane.b32.xlu0 %v569, 24
        %v785 = vpop.permute.xlu0 %784
        %786 = vrot.lane.b32.xlu0 %v571, 24
        %v787 = vpop.permute.xlu0 %786
        %788 = vrot.lane.b32.xlu0 %v573, 24
        %v789 = vpop.permute.xlu0 %788
        %790 = vrot.lane.b32.xlu0 %v575, 24
        %v791 = vpop.permute.xlu0 %790
        %792 = vrot.lane.b32.xlu0 %v577, 24
        %v793 = vpop.permute.xlu0 %792
        %794 = vrot.lane.b32.xlu0 %v579, 24
        %v795 = vpop.permute.xlu0 %794
        %812 = vrot.lane.b32.xlu0 %v581, 28
        %v813 = vpop.permute.xlu0 %812
        %814 = vrot.lane.b32.xlu0 %v583, 28
        %v815 = vpop.permute.xlu0 %814
        %816 = vrot.lane.b32.xlu0 %v585, 28
        %v817 = vpop.permute.xlu0 %816
        %818 = vrot.lane.b32.xlu0 %v587, 28
        %v819 = vpop.permute.xlu0 %818
        %820 = vrot.lane.b32.xlu0 %v589, 28
        %v821 = vpop.permute.xlu0 %820
        %822 = vrot.lane.b32.xlu0 %v591, 28
        %v823 = vpop.permute.xlu0 %822
        %824 = vrot.lane.b32.xlu0 %v593, 28
        %v825 = vpop.permute.xlu0 %824
        %826 = vrot.lane.b32.xlu0 %v595, 28
        %v827 = vpop.permute.xlu0 %826
        %844 = vrot.lane.b32.xlu0 %v597, 32
        %v845 = vpop.permute.xlu0 %844
        %846 = vrot.lane.b32.xlu0 %v599, 32
        %v847 = vpop.permute.xlu0 %846
        %848 = vrot.lane.b32.xlu0 %v601, 32
        %v849 = vpop.permute.xlu0 %848
        %850 = vrot.lane.b32.xlu0 %v603, 32
        %v851 = vpop.permute.xlu0 %850
        %852 = vrot.lane.b32.xlu0 %v605, 32
        %v853 = vpop.permute.xlu0 %852
        %854 = vrot.lane.b32.xlu0 %v607, 32
        %v855 = vpop.permute.xlu0 %854
        %856 = vrot.lane.b32.xlu0 %v609, 32
        %v857 = vpop.permute.xlu0 %856
        %858 = vrot.lane.b32.xlu0 %v611, 32
        %v859 = vpop.permute.xlu0 %858
        %v868 = vsel %vm331, %v470, %v621
        %v869 = vsel %vm331, %v472, %v623
        %v870 = vsel %vm331, %v474, %v625
        %v871 = vsel %vm331, %v476, %v627
        %v872 = vsel %vm331, %v478, %v629
        %v873 = vsel %vm331, %v480, %v631
        %v874 = vsel %vm331, %v482, %v633
        %v875 = vsel %vm331, %v484, %v635
        %v876 = vsel %vm377, %v868, %v653
        %v877 = vsel %vm377, %v869, %v655
        %v878 = vsel %vm377, %v870, %v657
        %v879 = vsel %vm377, %v871, %v659
        %v880 = vsel %vm377, %v872, %v661
        %v881 = vsel %vm377, %v873, %v663
        %v882 = vsel %vm377, %v874, %v665
        %v883 = vsel %vm377, %v875, %v667
        %vm884 = vcmask 97280
        %v885 = vsel %vm884, %v876, %v685
        %v886 = vsel %vm884, %v877, %v687
        %v887 = vsel %vm884, %v878, %v689
        %v888 = vsel %vm884, %v879, %v691
        %v889 = vsel %vm884, %v880, %v693
        %v890 = vsel %vm884, %v881, %v695
        %v891 = vsel %vm884, %v882, %v697
        %v892 = vsel %vm884, %v883, %v699
        %vm893 = vcmask 130048
        %v894 = vsel %vm893, %v885, %v717
        %v895 = vsel %vm893, %v886, %v719
        %v896 = vsel %vm893, %v887, %v721
        %v897 = vsel %vm893, %v888, %v723
        %v898 = vsel %vm893, %v889, %v725
        %v899 = vsel %vm893, %v890, %v727
        %v900 = vsel %vm893, %v891, %v729
        %v901 = vsel %vm893, %v892, %v731
        %vm902 = vcmask 162816
        %v903 = vsel %vm902, %v894, %v749
        %v904 = vsel %vm902, %v895, %v751
        %v905 = vsel %vm902, %v896, %v753
        %v906 = vsel %vm902, %v897, %v755
        %v907 = vsel %vm902, %v898, %v757
        %v908 = vsel %vm902, %v899, %v759
        %v909 = vsel %vm902, %v900, %v761
        %v910 = vsel %vm902, %v901, %v763
        %vm911 = vcmask 195584
        %v912 = vsel %vm911, %v903, %v781
        %v913 = vsel %vm911, %v904, %v783
        %v914 = vsel %vm911, %v905, %v785
        %v915 = vsel %vm911, %v906, %v787
        %v916 = vsel %vm911, %v907, %v789
        %v917 = vsel %vm911, %v908, %v791
        %v918 = vsel %vm911, %v909, %v793
        %v919 = vsel %vm911, %v910, %v795
        %vm920 = vcmask 228352
        %v921 = vsel %vm920, %v912, %v813
        %v922 = vsel %vm920, %v913, %v815
        %v923 = vsel %vm920, %v914, %v817
        %v924 = vsel %vm920, %v915, %v819
        %v925 = vsel %vm920, %v916, %v821
        %v926 = vsel %vm920, %v917, %v823
        %v927 = vsel %vm920, %v918, %v825
        %v928 = vsel %vm920, %v919, %v827
        %vm929 = vcmask 261120
        %v930 = vsel %vm929, %v921, %v845
        %v931 = vsel %vm929, %v922, %v847
        %v932 = vsel %vm929, %v923, %v849
        %v933 = vsel %vm929, %v924, %v851
        %v934 = vsel %vm929, %v925, %v853
        %v935 = vsel %vm929, %v926, %v855
        %v936 = vsel %vm929, %v927, %v857
        %v937 = vsel %vm929, %v928, %v859
        %v938 = vld [vmem:[%s1] sm:$0xff]
        %v939 = vld [vmem:[%s1 + $0x8] sm:$0xff]
        %v940 = vld [vmem:[%s1 + $0x10] sm:$0xff]
        %v941 = vld [vmem:[%s1 + $0x18] sm:$0xff]
        %v942 = vld [vmem:[%s1 + $0x20] sm:$0xf]
        %vm943 = vcmask 293888
        %v945 = vsel %vm943, %v930, 0
        %v948 = vsel %vm943, %v931, 0
        %v951 = vsel %vm943, %v932, 0
        %v954 = vsel %vm943, %v933, 0
        %v957 = vsel %vm943, %v934, 0
        %v960 = vsel %vm943, %v935, 0
        %v963 = vsel %vm943, %v936, 0
        %v966 = vsel %vm943, %v937, 0
        %vm968 = vcmask 1043456
        %v970 = vsel %vm968, %v942, 0
        %972 = vmatprep.subr.mxu0 0.0
        %973 = vmatpush1.msra.mxu0 %v938
        %974 = vmatprep.subr.mxu0 0.0
        %975 = vmatpush1.msra.mxu0 %v939
        %976 = vmatprep.subr.mxu0 0.0
        %977 = vmatpush1.msra.mxu0 %v940
        %978 = vmatprep.subr.mxu0 0.0
        %979 = vmatpush1.msra.mxu0 %v941
        %980 = vmatprep.subr.mxu0 0.0
        %981 = vmatpush1.msra.mxu0 %v970
        %982 = vmatprep.subr.mxu0 0.0
        %983 = vmatpush1.msra.mxu0 0.0
        %984 = vmatprep.subr.mxu0 0.0
        %985 = vmatpush1.msra.mxu0 0.0
        %986 = vmatprep.subr.mxu0 0.0
        %987 = vmatpush1.msra.mxu0 0.0
        %988 = vmatprep.subr.mxu0 0.0
        %989 = vmatpush1.msra.mxu0 0.0
        %990 = vmatprep.subr.mxu0 0.0
        %991 = vmatpush1.msra.mxu0 0.0
        %992 = vmatprep.subr.mxu0 0.0
        %993 = vmatpush1.msra.mxu0 0.0
        %994 = vmatprep.subr.mxu0 0.0
        %995 = vmatpush1.msra.mxu0 0.0
        %996 = vmatprep.subr.mxu0 0.0
        %997 = vmatpush1.msra.mxu0 0.0
        %998 = vmatprep.subr.mxu0 0.0
        %999 = vmatpush1.msra.mxu0 0.0
        %1000 = vmatprep.subr.mxu0 0.0
        %1001 = vmatpush1.msra.mxu0 0.0
        %1002 = vmatprep.subr.mxu0 0.0
        %1003 = vmatpush1.msra.mxu0 0.0
        %1004 = vmatprep.subr.mxu0 0.0
        %1005 = vmatpush1.msra.mxu0 0.0
        %1006 = vmatprep.subr.mxu0 0.0
        %1007 = vmatpush1.msra.mxu0 0.0
        %1008 = vmatprep.subr.mxu0 0.0
        %1009 = vmatpush1.msra.mxu0 0.0
        %1010 = vmatprep.subr.mxu0 0.0
        %1011 = vmatpush1.msra.mxu0 0.0
        %1012 = vmatprep.subr.mxu0 0.0
        %1013 = vmatpush1.msra.mxu0 0.0
        %1014 = vmatprep.subr.mxu0 0.0
        %1015 = vmatpush1.msra.mxu0 0.0
        %1016 = vmatprep.subr.mxu0 0.0
        %1017 = vmatpush1.msra.mxu0 0.0
        %1018 = vmatprep.subr.mxu0 0.0
        %1019 = vmatpush1.msra.mxu0 0.0
        %1020 = vmatprep.subr.mxu0 0.0
        %1021 = vmatpush1.msra.mxu0 0.0
        %1022 = vmatprep.subr.mxu0 0.0
        %1023 = vmatpush1.msra.mxu0 0.0
        %1024 = vmatprep.subr.mxu0 0.0
        %1025 = vmatpush1.msra.mxu0 0.0
        %1026 = vmatprep.subr.mxu0 0.0
        %1027 = vmatpush1.msra.mxu0 0.0
        %1028 = vmatprep.subr.mxu0 0.0
        %1029 = vmatpush1.msra.mxu0 0.0
        %1030 = vmatprep.subr.mxu0 0.0
        %1031 = vmatpush1.msra.mxu0 0.0
        %1032 = vmatprep.subr.mxu0 0.0
        %1033 = vmatpush1.msra.mxu0 0.0
        %1034 = vmatprep.subr.mxu0 0.0
        %1035 = vmatpush1.msra.mxu0 0.0
        %1036 = vmatprep.mubr.f32.mxu0 0.0
        %1037 = vmatmul.mubr.f32.gmra.mrb[0].mxu0 %v945
        %v1038 = vpop.f32.mrb[0].mxu0
        %v1039 = vadd.f32 0.0, %v1038
        %v1040 = vpop.f32.mrb[0].mxu0
        %1041 = vmatprep.mubr.f32.mxu0 0.0
        %1042 = vmatmul.mubr.f32.gmra.mrb[0].mxu0 %v948
        %v1043 = vpop.f32.mrb[0].mxu0
        %v1044 = vadd.f32 0.0, %v1043
        %v1045 = vpop.f32.mrb[0].mxu0
        %1046 = vmatprep.mubr.f32.mxu0 0.0
        %1047 = vmatmul.mubr.f32.gmra.mrb[0].mxu0 %v951
        %v1048 = vpop.f32.mrb[0].mxu0
        %v1049 = vadd.f32 0.0, %v1048
        %v1050 = vpop.f32.mrb[0].mxu0
        %1051 = vmatprep.mubr.f32.mxu0 0.0
        %1052 = vmatmul.mubr.f32.gmra.mrb[0].mxu0 %v954
        %v1053 = vpop.f32.mrb[0].mxu0
        %v1054 = vadd.f32 0.0, %v1053
        %v1055 = vpop.f32.mrb[0].mxu0
        %1056 = vmatprep.mubr.f32.mxu0 0.0
        %1057 = vmatmul.mubr.f32.gmra.mrb[0].mxu0 %v957
        %v1058 = vpop.f32.mrb[0].mxu0
        %v1059 = vadd.f32 0.0, %v1058
        %v1060 = vpop.f32.mrb[0].mxu0
        %1061 = vmatprep.mubr.f32.mxu0 0.0
        %1062 = vmatmul.mubr.f32.gmra.mrb[0].mxu0 %v960
        %v1063 = vpop.f32.mrb[0].mxu0
        %v1064 = vadd.f32 0.0, %v1063
        %v1065 = vpop.f32.mrb[0].mxu0
        %1066 = vmatprep.mubr.f32.mxu0 0.0
        %1067 = vmatmul.mubr.f32.gmra.mrb[0].mxu0 %v963
        %v1068 = vpop.f32.mrb[0].mxu0
        %v1069 = vadd.f32 0.0, %v1068
        %v1070 = vpop.f32.mrb[0].mxu0
        %1071 = vmatprep.mubr.f32.mxu0 0.0
        %1072 = vmatmul.mubr.f32.gmra.mrb[0].mxu0 %v966
        %v1073 = vpop.f32.mrb[0].mxu0
        %v1074 = vadd.f32 0.0, %v1073
        %v1075 = vpop.f32.mrb[0].mxu0
        %1076 = vdwg.mxu0
        %v1077 = vld [vmem:[%s2] sm:$0x1]
        %v1079 = vlaneseq
        %v1080 = vshrl.u32 %v1079, 7
        %v1081 = vsub.s32 0, %v1080
        %v1082 = vrot.slane %v1077, %v1081
        %v1084 = vmul.f32 %v1039, %v1082
        %v1085 = vmul.f32 %v1044, %v1082
        %v1086 = vmul.f32 %v1049, %v1082
        %v1087 = vmul.f32 %v1054, %v1082
        %v1088 = vmul.f32 %v1059, %v1082
        %v1089 = vmul.f32 %v1064, %v1082
        %v1090 = vmul.f32 %v1069, %v1082
        %v1091 = vmul.f32 %v1074, %v1082
        %v1092 = vld [vmem:[%s3] sm:$0x1]
        %v1094 = vlaneseq
        %v1095 = vshrl.u32 %v1094, 7
        %v1096 = vsub.s32 0, %v1095
        %v1097 = vrot.slane %v1092, %v1096
        %v1099 = vadd.f32 %v1084, %v1097
        %v1100 = vadd.f32 %v1085, %v1097
        %v1101 = vadd.f32 %v1086, %v1097
        %v1102 = vadd.f32 %v1087, %v1097
        %v1103 = vadd.f32 %v1088, %v1097
        %v1104 = vadd.f32 %v1089, %v1097
        %v1105 = vadd.f32 %v1090, %v1097
        %v1106 = vadd.f32 %v1091, %v1097
        %v1107 = vmax.f32 %v1099, 0.0
        %v1108 = vmax.f32 %v1100, 0.0
        %v1109 = vmax.f32 %v1101, 0.0
        %v1110 = vmax.f32 %v1102, 0.0
        %v1111 = vmax.f32 %v1103, 0.0
        %v1112 = vmax.f32 %v1104, 0.0
        %v1113 = vmax.f32 %v1105, 0.0
        %v1114 = vmax.f32 %v1106, 0.0
        %s1115 = scalar_lea.vmem [#allocation3], 16
        %1116 = vst.msk [vmem:[%s1115 + $0x1] sm:$0xff] %vm377, %v1107
        %1117 = vst.msk [vmem:[%s1115 + $0x11] sm:$0xff] %vm377, %v1108
        %1118 = vst.msk [vmem:[%s1115 + $0x21] sm:$0xff] %vm377, %v1109
        %1119 = vst.msk [vmem:[%s1115 + $0x31] sm:$0xff] %vm377, %v1110
        %1120 = vst.msk [vmem:[%s1115 + $0x41] sm:$0xff] %vm377, %v1111
        %1121 = vst.msk [vmem:[%s1115 + $0x51] sm:$0xff] %vm377, %v1112
        %1122 = vst.msk [vmem:[%s1115 + $0x61] sm:$0xff] %vm377, %v1113
        %1123 = vst.msk [vmem:[%s1115 + $0x71] sm:$0xff] %vm377, %v1114
        %v1124 = vld [vmem:[%s7] sm:$0x1]
        %v1126 = vlaneseq
        %v1127 = vshrl.u32 %v1126, 7
        %v1128 = vsub.s32 0, %v1127
        %v1129 = vrot.slane %v1124, %v1128
        %1130 = vrot.lane.b32.xlu0 %v1129, 8
        %v1131 = vpop.permute.xlu0 %1130
        %v1133 = vmul.f32 %v1039, %v1131
        %v1134 = vmul.f32 %v1044, %v1131
        %v1135 = vmul.f32 %v1049, %v1131
        %v1136 = vmul.f32 %v1054, %v1131
        %v1137 = vmul.f32 %v1059, %v1131
        %v1138 = vmul.f32 %v1064, %v1131
        %v1139 = vmul.f32 %v1069, %v1131
        %v1140 = vmul.f32 %v1074, %v1131
        %v1141 = vld [vmem:[%s8] sm:$0x1]
        %v1143 = vlaneseq
        %v1144 = vshrl.u32 %v1143, 7
        %v1145 = vsub.s32 0, %v1144
        %v1146 = vrot.slane %v1141, %v1145
        %1147 = vrot.lane.b32.xlu0 %v1146, 8
        %v1148 = vpop.permute.xlu0 %1147
        %v1150 = vadd.f32 %v1133, %v1148
        %v1151 = vadd.f32 %v1134, %v1148
        %v1152 = vadd.f32 %v1135, %v1148
        %v1153 = vadd.f32 %v1136, %v1148
        %v1154 = vadd.f32 %v1137, %v1148
        %v1155 = vadd.f32 %v1138, %v1148
        %v1156 = vadd.f32 %v1139, %v1148
        %v1157 = vadd.f32 %v1140, %v1148
        %v1158 = vld [vmem:[#allocation3] sm:$0xff]
        %v1159 = vld [vmem:[#allocation3 + $0x10] sm:$0xff]
        %v1160 = vld [vmem:[#allocation3 + $0x20] sm:$0xff]
        %v1161 = vld [vmem:[#allocation3 + $0x30] sm:$0xff]
        %v1162 = vld [vmem:[#allocation3 + $0x40] sm:$0xff]
        %v1163 = vld [vmem:[#allocation3 + $0x50] sm:$0xff]
        %v1164 = vld [vmem:[#allocation3 + $0x60] sm:$0xff]
        %v1165 = vld [vmem:[#allocation3 + $0x70] sm:$0xff]
        %v1166 = vld [vmem:[#allocation3 + $0x1] sm:$0xff]
        %v1167 = vld [vmem:[#allocation3 + $0x11] sm:$0xff]
        %v1168 = vld [vmem:[#allocation3 + $0x21] sm:$0xff]
        %v1169 = vld [vmem:[#allocation3 + $0x31] sm:$0xff]
        %v1170 = vld [vmem:[#allocation3 + $0x41] sm:$0xff]
        %v1171 = vld [vmem:[#allocation3 + $0x51] sm:$0xff]
        %v1172 = vld [vmem:[#allocation3 + $0x61] sm:$0xff]
        %v1173 = vld [vmem:[#allocation3 + $0x71] sm:$0xff]
        %v1174 = vld [vmem:[#allocation3 + $0x2] sm:$0xff]
        %v1175 = vld [vmem:[#allocation3 + $0x12] sm:$0xff]
        %v1176 = vld [vmem:[#allocation3 + $0x22] sm:$0xff]
        %v1177 = vld [vmem:[#allocation3 + $0x32] sm:$0xff]
        %v1178 = vld [vmem:[#allocation3 + $0x42] sm:$0xff]
        %v1179 = vld [vmem:[#allocation3 + $0x52] sm:$0xff]
        %v1180 = vld [vmem:[#allocation3 + $0x62] sm:$0xff]
        %v1181 = vld [vmem:[#allocation3 + $0x72] sm:$0xff]
        %v1182 = vld [vmem:[%s1115] sm:$0xff]
        %v1183 = vld [vmem:[%s1115 + $0x10] sm:$0xff]
        %v1184 = vld [vmem:[%s1115 + $0x20] sm:$0xff]
        %v1185 = vld [vmem:[%s1115 + $0x30] sm:$0xff]
        %v1186 = vld [vmem:[%s1115 + $0x40] sm:$0xff]
        %v1187 = vld [vmem:[%s1115 + $0x50] sm:$0xff]
        %v1188 = vld [vmem:[%s1115 + $0x60] sm:$0xff]
        %v1189 = vld [vmem:[%s1115 + $0x70] sm:$0xff]
        %v1190 = vld [vmem:[%s1115 + $0x1] sm:$0xff]
        %v1191 = vld [vmem:[%s1115 + $0x11] sm:$0xff]
        %v1192 = vld [vmem:[%s1115 + $0x21] sm:$0xff]
        %v1193 = vld [vmem:[%s1115 + $0x31] sm:$0xff]
        %v1194 = vld [vmem:[%s1115 + $0x41] sm:$0xff]
        %v1195 = vld [vmem:[%s1115 + $0x51] sm:$0xff]
        %v1196 = vld [vmem:[%s1115 + $0x61] sm:$0xff]
        %v1197 = vld [vmem:[%s1115 + $0x71] sm:$0xff]
        %v1198 = vld [vmem:[%s1115 + $0x2] sm:$0xff]
        %v1199 = vld [vmem:[%s1115 + $0x12] sm:$0xff]
        %v1200 = vld [vmem:[%s1115 + $0x22] sm:$0xff]
        %v1201 = vld [vmem:[%s1115 + $0x32] sm:$0xff]
        %v1202 = vld [vmem:[%s1115 + $0x42] sm:$0xff]
        %v1203 = vld [vmem:[%s1115 + $0x52] sm:$0xff]
        %v1204 = vld [vmem:[%s1115 + $0x62] sm:$0xff]
        %v1205 = vld [vmem:[%s1115 + $0x72] sm:$0xff]
        %s1206 = scalar_lea.vmem [#allocation3], 32
        %v1207 = vld [vmem:[%s1206] sm:$0xff]
        %v1208 = vld [vmem:[%s1206 + $0x10] sm:$0xff]
        %v1209 = vld [vmem:[%s1206 + $0x20] sm:$0xff]
        %v1210 = vld [vmem:[%s1206 + $0x30] sm:$0xff]
        %v1211 = vld [vmem:[%s1206 + $0x40] sm:$0xff]
        %v1212 = vld [vmem:[%s1206 + $0x50] sm:$0xff]
        %v1213 = vld [vmem:[%s1206 + $0x60] sm:$0xff]
        %v1214 = vld [vmem:[%s1206 + $0x70] sm:$0xff]
        %v1215 = vld [vmem:[%s1206 + $0x1] sm:$0xff]
        %v1216 = vld [vmem:[%s1206 + $0x11] sm:$0xff]
        %v1217 = vld [vmem:[%s1206 + $0x21] sm:$0xff]
        %v1218 = vld [vmem:[%s1206 + $0x31] sm:$0xff]
        %v1219 = vld [vmem:[%s1206 + $0x41] sm:$0xff]
        %v1220 = vld [vmem:[%s1206 + $0x51] sm:$0xff]
        %v1221 = vld [vmem:[%s1206 + $0x61] sm:$0xff]
        %v1222 = vld [vmem:[%s1206 + $0x71] sm:$0xff]
        %v1223 = vld [vmem:[%s1206 + $0x2] sm:$0xff]
        %v1224 = vld [vmem:[%s1206 + $0x12] sm:$0xff]
        %v1225 = vld [vmem:[%s1206 + $0x22] sm:$0xff]
        %v1226 = vld [vmem:[%s1206 + $0x32] sm:$0xff]
        %v1227 = vld [vmem:[%s1206 + $0x42] sm:$0xff]
        %v1228 = vld [vmem:[%s1206 + $0x52] sm:$0xff]
        %v1229 = vld [vmem:[%s1206 + $0x62] sm:$0xff]
        %v1230 = vld [vmem:[%s1206 + $0x72] sm:$0xff]
        %1239 = vrot.lane.b32.xlu0 %v1166, 8
        %v1240 = vpop.permute.xlu0 %1239
        %1241 = vrot.lane.b32.xlu0 %v1167, 8
        %v1242 = vpop.permute.xlu0 %1241
        %1243 = vrot.lane.b32.xlu0 %v1168, 8
        %v1244 = vpop.permute.xlu0 %1243
        %1245 = vrot.lane.b32.xlu0 %v1169, 8
        %v1246 = vpop.permute.xlu0 %1245
        %1247 = vrot.lane.b32.xlu0 %v1170, 8
        %v1248 = vpop.permute.xlu0 %1247
        %1249 = vrot.lane.b32.xlu0 %v1171, 8
        %v1250 = vpop.permute.xlu0 %1249
        %1251 = vrot.lane.b32.xlu0 %v1172, 8
        %v1252 = vpop.permute.xlu0 %1251
        %1253 = vrot.lane.b32.xlu0 %v1173, 8
        %v1254 = vpop.permute.xlu0 %1253
        %1271 = vrot.lane.b32.xlu0 %v1174, 16
        %v1272 = vpop.permute.xlu0 %1271
        %1273 = vrot.lane.b32.xlu0 %v1175, 16
        %v1274 = vpop.permute.xlu0 %1273
        %1275 = vrot.lane.b32.xlu0 %v1176, 16
        %v1276 = vpop.permute.xlu0 %1275
        %1277 = vrot.lane.b32.xlu0 %v1177, 16
        %v1278 = vpop.permute.xlu0 %1277
        %1279 = vrot.lane.b32.xlu0 %v1178, 16
        %v1280 = vpop.permute.xlu0 %1279
        %1281 = vrot.lane.b32.xlu0 %v1179, 16
        %v1282 = vpop.permute.xlu0 %1281
        %1283 = vrot.lane.b32.xlu0 %v1180, 16
        %v1284 = vpop.permute.xlu0 %1283
        %1285 = vrot.lane.b32.xlu0 %v1181, 16
        %v1286 = vpop.permute.xlu0 %1285
        %1303 = vrot.lane.b32.xlu0 %v1182, 24
        %v1304 = vpop.permute.xlu0 %1303
        %1305 = vrot.lane.b32.xlu0 %v1183, 24
        %v1306 = vpop.permute.xlu0 %1305
        %1307 = vrot.lane.b32.xlu0 %v1184, 24
        %v1308 = vpop.permute.xlu0 %1307
        %1309 = vrot.lane.b32.xlu0 %v1185, 24
        %v1310 = vpop.permute.xlu0 %1309
        %1311 = vrot.lane.b32.xlu0 %v1186, 24
        %v1312 = vpop.permute.xlu0 %1311
        %1313 = vrot.lane.b32.xlu0 %v1187, 24
        %v1314 = vpop.permute.xlu0 %1313
        %1315 = vrot.lane.b32.xlu0 %v1188, 24
        %v1316 = vpop.permute.xlu0 %1315
        %1317 = vrot.lane.b32.xlu0 %v1189, 24
        %v1318 = vpop.permute.xlu0 %1317
        %1335 = vrot.lane.b32.xlu0 %v1190, 32
        %v1336 = vpop.permute.xlu0 %1335
        %1337 = vrot.lane.b32.xlu0 %v1191, 32
        %v1338 = vpop.permute.xlu0 %1337
        %1339 = vrot.lane.b32.xlu0 %v1192, 32
        %v1340 = vpop.permute.xlu0 %1339
        %1341 = vrot.lane.b32.xlu0 %v1193, 32
        %v1342 = vpop.permute.xlu0 %1341
        %1343 = vrot.lane.b32.xlu0 %v1194, 32
        %v1344 = vpop.permute.xlu0 %1343
        %1345 = vrot.lane.b32.xlu0 %v1195, 32
        %v1346 = vpop.permute.xlu0 %1345
        %1347 = vrot.lane.b32.xlu0 %v1196, 32
        %v1348 = vpop.permute.xlu0 %1347
        %1349 = vrot.lane.b32.xlu0 %v1197, 32
        %v1350 = vpop.permute.xlu0 %1349
        %1367 = vrot.lane.b32.xlu0 %v1198, 40
        %v1368 = vpop.permute.xlu0 %1367
        %1369 = vrot.lane.b32.xlu0 %v1199, 40
        %v1370 = vpop.permute.xlu0 %1369
        %1371 = vrot.lane.b32.xlu0 %v1200, 40
        %v1372 = vpop.permute.xlu0 %1371
        %1373 = vrot.lane.b32.xlu0 %v1201, 40
        %v1374 = vpop.permute.xlu0 %1373
        %1375 = vrot.lane.b32.xlu0 %v1202, 40
        %v1376 = vpop.permute.xlu0 %1375
        %1377 = vrot.lane.b32.xlu0 %v1203, 40
        %v1378 = vpop.permute.xlu0 %1377
        %1379 = vrot.lane.b32.xlu0 %v1204, 40
        %v1380 = vpop.permute.xlu0 %1379
        %1381 = vrot.lane.b32.xlu0 %v1205, 40
        %v1382 = vpop.permute.xlu0 %1381
        %1399 = vrot.lane.b32.xlu0 %v1207, 48
        %v1400 = vpop.permute.xlu0 %1399
        %1401 = vrot.lane.b32.xlu0 %v1208, 48
        %v1402 = vpop.permute.xlu0 %1401
        %1403 = vrot.lane.b32.xlu0 %v1209, 48
        %v1404 = vpop.permute.xlu0 %1403
        %1405 = vrot.lane.b32.xlu0 %v1210, 48
        %v1406 = vpop.permute.xlu0 %1405
        %1407 = vrot.lane.b32.xlu0 %v1211, 48
        %v1408 = vpop.permute.xlu0 %1407
        %1409 = vrot.lane.b32.xlu0 %v1212, 48
        %v1410 = vpop.permute.xlu0 %1409
        %1411 = vrot.lane.b32.xlu0 %v1213, 48
        %v1412 = vpop.permute.xlu0 %1411
        %1413 = vrot.lane.b32.xlu0 %v1214, 48
        %v1414 = vpop.permute.xlu0 %1413
        %1431 = vrot.lane.b32.xlu0 %v1215, 56
        %v1432 = vpop.permute.xlu0 %1431
        %1433 = vrot.lane.b32.xlu0 %v1216, 56
        %v1434 = vpop.permute.xlu0 %1433
        %1435 = vrot.lane.b32.xlu0 %v1217, 56
        %v1436 = vpop.permute.xlu0 %1435
        %1437 = vrot.lane.b32.xlu0 %v1218, 56
        %v1438 = vpop.permute.xlu0 %1437
        %1439 = vrot.lane.b32.xlu0 %v1219, 56
        %v1440 = vpop.permute.xlu0 %1439
        %1441 = vrot.lane.b32.xlu0 %v1220, 56
        %v1442 = vpop.permute.xlu0 %1441
        %1443 = vrot.lane.b32.xlu0 %v1221, 56
        %v1444 = vpop.permute.xlu0 %1443
        %1445 = vrot.lane.b32.xlu0 %v1222, 56
        %v1446 = vpop.permute.xlu0 %1445
        %1463 = vrot.lane.b32.xlu0 %v1223, 64
        %v1464 = vpop.permute.xlu0 %1463
        %1465 = vrot.lane.b32.xlu0 %v1224, 64
        %v1466 = vpop.permute.xlu0 %1465
        %1467 = vrot.lane.b32.xlu0 %v1225, 64
        %v1468 = vpop.permute.xlu0 %1467
        %1469 = vrot.lane.b32.xlu0 %v1226, 64
        %v1470 = vpop.permute.xlu0 %1469
        %1471 = vrot.lane.b32.xlu0 %v1227, 64
        %v1472 = vpop.permute.xlu0 %1471
        %1473 = vrot.lane.b32.xlu0 %v1228, 64
        %v1474 = vpop.permute.xlu0 %1473
        %1475 = vrot.lane.b32.xlu0 %v1229, 64
        %v1476 = vpop.permute.xlu0 %1475
        %1477 = vrot.lane.b32.xlu0 %v1230, 64
        %v1478 = vpop.permute.xlu0 %1477
        %v1487 = vsel %vm377, %v1158, %v1240
        %v1488 = vsel %vm377, %v1159, %v1242
        %v1489 = vsel %vm377, %v1160, %v1244
        %v1490 = vsel %vm377, %v1161, %v1246
        %v1491 = vsel %vm377, %v1162, %v1248
        %v1492 = vsel %vm377, %v1163, %v1250
        %v1493 = vsel %vm377, %v1164, %v1252
        %v1494 = vsel %vm377, %v1165, %v1254
        %v1495 = vsel %vm893, %v1487, %v1272
        %v1496 = vsel %vm893, %v1488, %v1274
        %v1497 = vsel %vm893, %v1489, %v1276
        %v1498 = vsel %vm893, %v1490, %v1278
        %v1499 = vsel %vm893, %v1491, %v1280
        %v1500 = vsel %vm893, %v1492, %v1282
        %v1501 = vsel %vm893, %v1493, %v1284
        %v1502 = vsel %vm893, %v1494, %v1286
        %v1503 = vsel %vm911, %v1495, %v1304
        %v1504 = vsel %vm911, %v1496, %v1306
        %v1505 = vsel %vm911, %v1497, %v1308
        %v1506 = vsel %vm911, %v1498, %v1310
        %v1507 = vsel %vm911, %v1499, %v1312
        %v1508 = vsel %vm911, %v1500, %v1314
        %v1509 = vsel %vm911, %v1501, %v1316
        %v1510 = vsel %vm911, %v1502, %v1318
        %v1511 = vsel %vm929, %v1503, %v1336
        %v1512 = vsel %vm929, %v1504, %v1338
        %v1513 = vsel %vm929, %v1505, %v1340
        %v1514 = vsel %vm929, %v1506, %v1342
        %v1515 = vsel %vm929, %v1507, %v1344
        %v1516 = vsel %vm929, %v1508, %v1346
        %v1517 = vsel %vm929, %v1509, %v1348
        %v1518 = vsel %vm929, %v1510, %v1350
        %vm1519 = vcmask 326656
        %v1520 = vsel %vm1519, %v1511, %v1368
        %v1521 = vsel %vm1519, %v1512, %v1370
        %v1522 = vsel %vm1519, %v1513, %v1372
        %v1523 = vsel %vm1519, %v1514, %v1374
        %v1524 = vsel %vm1519, %v1515, %v1376
        %v1525 = vsel %vm1519, %v1516, %v1378
        %v1526 = vsel %vm1519, %v1517, %v1380
        %v1527 = vsel %vm1519, %v1518, %v1382
        %vm1528 = vcmask 392192
        %v1529 = vsel %vm1528, %v1520, %v1400
        %v1530 = vsel %vm1528, %v1521, %v1402
        %v1531 = vsel %vm1528, %v1522, %v1404
        %v1532 = vsel %vm1528, %v1523, %v1406
        %v1533 = vsel %vm1528, %v1524, %v1408
        %v1534 = vsel %vm1528, %v1525, %v1410
        %v1535 = vsel %vm1528, %v1526, %v1412
        %v1536 = vsel %vm1528, %v1527, %v1414
        %vm1537 = vcmask 457728
        %v1538 = vsel %vm1537, %v1529, %v1432
        %v1539 = vsel %vm1537, %v1530, %v1434
        %v1540 = vsel %vm1537, %v1531, %v1436
        %v1541 = vsel %vm1537, %v1532, %v1438
        %v1542 = vsel %vm1537, %v1533, %v1440
        %v1543 = vsel %vm1537, %v1534, %v1442
        %v1544 = vsel %vm1537, %v1535, %v1444
        %v1545 = vsel %vm1537, %v1536, %v1446
        %vm1546 = vcmask 523264
        %v1547 = vsel %vm1546, %v1538, %v1464
        %v1548 = vsel %vm1546, %v1539, %v1466
        %v1549 = vsel %vm1546, %v1540, %v1468
        %v1550 = vsel %vm1546, %v1541, %v1470
        %v1551 = vsel %vm1546, %v1542, %v1472
        %v1552 = vsel %vm1546, %v1543, %v1474
        %v1553 = vsel %vm1546, %v1544, %v1476
        %v1554 = vsel %vm1546, %v1545, %v1478
        %v1555 = vld [vmem:[%s4] sm:$0xff]
        %v1556 = vld [vmem:[%s4 + $0x8] sm:$0xff]
        %v1557 = vld [vmem:[%s4 + $0x10] sm:$0xff]
        %v1558 = vld [vmem:[%s4 + $0x18] sm:$0xff]
        %v1559 = vld [vmem:[%s4 + $0x20] sm:$0xff]
        %v1560 = vld [vmem:[%s4 + $0x28] sm:$0xff]
        %v1561 = vld [vmem:[%s4 + $0x30] sm:$0xff]
        %v1562 = vld [vmem:[%s4 + $0x38] sm:$0xff]
        %v1563 = vld [vmem:[%s4 + $0x40] sm:$0xff]
        %vm1564 = vcmask 588800
        %v1566 = vsel %vm1564, %v1547, 0
        %v1569 = vsel %vm1564, %v1548, 0
        %v1572 = vsel %vm1564, %v1549, 0
        %v1575 = vsel %vm1564, %v1550, 0
        %v1578 = vsel %vm1564, %v1551, 0
        %v1581 = vsel %vm1564, %v1552, 0
        %v1584 = vsel %vm1564, %v1553, 0
        %v1587 = vsel %vm1564, %v1554, 0
        %1589 = vmatprep.subr.mxu0 0.0
        %1590 = vmatpush1.msra.mxu0 %v1555
        %1591 = vmatprep.subr.mxu0 0.0
        %1592 = vmatpush1.msra.mxu0 %v1556
        %1593 = vmatprep.subr.mxu0 0.0
        %1594 = vmatpush1.msra.mxu0 %v1557
        %1595 = vmatprep.subr.mxu0 0.0
        %1596 = vmatpush1.msra.mxu0 %v1558
        %1597 = vmatprep.subr.mxu0 0.0
        %1598 = vmatpush1.msra.mxu0 %v1559
        %1599 = vmatprep.subr.mxu0 0.0
        %1600 = vmatpush1.msra.mxu0 %v1560
        %1601 = vmatprep.subr.mxu0 0.0
        %1602 = vmatpush1.msra.mxu0 %v1561
        %1603 = vmatprep.subr.mxu0 0.0
        %1604 = vmatpush1.msra.mxu0 %v1562
        %1605 = vmatprep.subr.mxu0 0.0
        %1606 = vmatpush1.msra.mxu0 %v1563
        %1607 = vmatprep.subr.mxu0 0.0
        %1608 = vmatpush1.msra.mxu0 0.0
        %1609 = vmatprep.subr.mxu0 0.0
        %1610 = vmatpush1.msra.mxu0 0.0
        %1611 = vmatprep.subr.mxu0 0.0
        %1612 = vmatpush1.msra.mxu0 0.0
        %1613 = vmatprep.subr.mxu0 0.0
        %1614 = vmatpush1.msra.mxu0 0.0
        %1615 = vmatprep.subr.mxu0 0.0
        %1616 = vmatpush1.msra.mxu0 0.0
        %1617 = vmatprep.subr.mxu0 0.0
        %1618 = vmatpush1.msra.mxu0 0.0
        %1619 = vmatprep.subr.mxu0 0.0
        %1620 = vmatpush1.msra.mxu0 0.0
        %1621 = vmatprep.subr.mxu0 0.0
        %1622 = vmatpush1.msra.mxu0 0.0
        %1623 = vmatprep.subr.mxu0 0.0
        %1624 = vmatpush1.msra.mxu0 0.0
        %1625 = vmatprep.subr.mxu0 0.0
        %1626 = vmatpush1.msra.mxu0 0.0
        %1627 = vmatprep.subr.mxu0 0.0
        %1628 = vmatpush1.msra.mxu0 0.0
        %1629 = vmatprep.subr.mxu0 0.0
        %1630 = vmatpush1.msra.mxu0 0.0
        %1631 = vmatprep.subr.mxu0 0.0
        %1632 = vmatpush1.msra.mxu0 0.0
        %1633 = vmatprep.subr.mxu0 0.0
        %1634 = vmatpush1.msra.mxu0 0.0
        %1635 = vmatprep.subr.mxu0 0.0
        %1636 = vmatpush1.msra.mxu0 0.0
        %1637 = vmatprep.subr.mxu0 0.0
        %1638 = vmatpush1.msra.mxu0 0.0
        %1639 = vmatprep.subr.mxu0 0.0
        %1640 = vmatpush1.msra.mxu0 0.0
        %1641 = vmatprep.subr.mxu0 0.0
        %1642 = vmatpush1.msra.mxu0 0.0
        %1643 = vmatprep.subr.mxu0 0.0
        %1644 = vmatpush1.msra.mxu0 0.0
        %1645 = vmatprep.subr.mxu0 0.0
        %1646 = vmatpush1.msra.mxu0 0.0
        %1647 = vmatprep.subr.mxu0 0.0
        %1648 = vmatpush1.msra.mxu0 0.0
        %1649 = vmatprep.subr.mxu0 0.0
        %1650 = vmatpush1.msra.mxu0 0.0
        %1651 = vmatprep.subr.mxu0 0.0
        %1652 = vmatpush1.msra.mxu0 0.0
        %1653 = vmatprep.mubr.f32.mxu0 0.0
        %1654 = vmatmul.mubr.f32.gmra.mrb[0].mxu0 %v1566
        %v1655 = vpop.f32.mrb[0].mxu0
        %v1656 = vadd.f32 0.0, %v1655
        %v1657 = vpop.f32.mrb[0].mxu0
        %1658 = vmatprep.mubr.f32.mxu0 0.0
        %1659 = vmatmul.mubr.f32.gmra.mrb[0].mxu0 %v1569
        %v1660 = vpop.f32.mrb[0].mxu0
        %v1661 = vadd.f32 0.0, %v1660
        %v1662 = vpop.f32.mrb[0].mxu0
        %1663 = vmatprep.mubr.f32.mxu0 0.0
        %1664 = vmatmul.mubr.f32.gmra.mrb[0].mxu0 %v1572
        %v1665 = vpop.f32.mrb[0].mxu0
        %v1666 = vadd.f32 0.0, %v1665
        %v1667 = vpop.f32.mrb[0].mxu0
        %1668 = vmatprep.mubr.f32.mxu0 0.0
        %1669 = vmatmul.mubr.f32.gmra.mrb[0].mxu0 %v1575
        %v1670 = vpop.f32.mrb[0].mxu0
        %v1671 = vadd.f32 0.0, %v1670
        %v1672 = vpop.f32.mrb[0].mxu0
        %1673 = vmatprep.mubr.f32.mxu0 0.0
        %1674 = vmatmul.mubr.f32.gmra.mrb[0].mxu0 %v1578
        %v1675 = vpop.f32.mrb[0].mxu0
        %v1676 = vadd.f32 0.0, %v1675
        %v1677 = vpop.f32.mrb[0].mxu0
        %1678 = vmatprep.mubr.f32.mxu0 0.0
        %1679 = vmatmul.mubr.f32.gmra.mrb[0].mxu0 %v1581
        %v1680 = vpop.f32.mrb[0].mxu0
        %v1681 = vadd.f32 0.0, %v1680
        %v1682 = vpop.f32.mrb[0].mxu0
        %1683 = vmatprep.mubr.f32.mxu0 0.0
        %1684 = vmatmul.mubr.f32.gmra.mrb[0].mxu0 %v1584
        %v1685 = vpop.f32.mrb[0].mxu0
        %v1686 = vadd.f32 0.0, %v1685
        %v1687 = vpop.f32.mrb[0].mxu0
        %1688 = vmatprep.mubr.f32.mxu0 0.0
        %1689 = vmatmul.mubr.f32.gmra.mrb[0].mxu0 %v1587
        %v1690 = vpop.f32.mrb[0].mxu0
        %v1691 = vadd.f32 0.0, %v1690
        %v1692 = vpop.f32.mrb[0].mxu0
        %1693 = vdwg.mxu0
        %v1694 = vld [vmem:[%s5] sm:$0x1]
        %v1696 = vlaneseq
        %v1697 = vshrl.u32 %v1696, 7
        %v1698 = vsub.s32 0, %v1697
        %v1699 = vrot.slane %v1694, %v1698
        %v1701 = vmul.f32 %v1656, %v1699
        %v1702 = vmul.f32 %v1661, %v1699
        %v1703 = vmul.f32 %v1666, %v1699
        %v1704 = vmul.f32 %v1671, %v1699
        %v1705 = vmul.f32 %v1676, %v1699
        %v1706 = vmul.f32 %v1681, %v1699
        %v1707 = vmul.f32 %v1686, %v1699
        %v1708 = vmul.f32 %v1691, %v1699
        %v1709 = vld [vmem:[%s6] sm:$0x1]
        %v1711 = vlaneseq
        %v1712 = vshrl.u32 %v1711, 7
        %v1713 = vsub.s32 0, %v1712
        %v1714 = vrot.slane %v1709, %v1713
        %v1716 = vadd.f32 %v1701, %v1714
        %v1717 = vadd.f32 %v1702, %v1714
        %v1718 = vadd.f32 %v1703, %v1714
        %v1719 = vadd.f32 %v1704, %v1714
        %v1720 = vadd.f32 %v1705, %v1714
        %v1721 = vadd.f32 %v1706, %v1714
        %v1722 = vadd.f32 %v1707, %v1714
        %v1723 = vadd.f32 %v1708, %v1714
        %1732 = vrot.lane.b32.xlu0 %v1150, 120
        %v1733 = vpop.permute.xlu0 %1732
        %1734 = vrot.lane.b32.xlu0 %v1151, 120
        %v1735 = vpop.permute.xlu0 %1734
        %1736 = vrot.lane.b32.xlu0 %v1152, 120
        %v1737 = vpop.permute.xlu0 %1736
        %1738 = vrot.lane.b32.xlu0 %v1153, 120
        %v1739 = vpop.permute.xlu0 %1738
        %1740 = vrot.lane.b32.xlu0 %v1154, 120
        %v1741 = vpop.permute.xlu0 %1740
        %1742 = vrot.lane.b32.xlu0 %v1155, 120
        %v1743 = vpop.permute.xlu0 %1742
        %1744 = vrot.lane.b32.xlu0 %v1156, 120
        %v1745 = vpop.permute.xlu0 %1744
        %1746 = vrot.lane.b32.xlu0 %v1157, 120
        %v1747 = vpop.permute.xlu0 %1746
        %v1756 = vadd.f32 %v1716, %v1733
        %v1757 = vadd.f32 %v1717, %v1735
        %v1758 = vadd.f32 %v1718, %v1737
        %v1759 = vadd.f32 %v1719, %v1739
        %v1760 = vadd.f32 %v1720, %v1741
        %v1761 = vadd.f32 %v1721, %v1743
        %v1762 = vadd.f32 %v1722, %v1745
        %v1763 = vadd.f32 %v1723, %v1747
        %v1764 = vmax.f32 %v1756, 0.0
        %v1765 = vmax.f32 %v1757, 0.0
        %v1766 = vmax.f32 %v1758, 0.0
        %v1767 = vmax.f32 %v1759, 0.0
        %v1768 = vmax.f32 %v1760, 0.0
        %v1769 = vmax.f32 %v1761, 0.0
        %v1770 = vmax.f32 %v1762, 0.0
        %v1771 = vmax.f32 %v1763, 0.0
        %1772 = vxpose.xlu0.b32.start [1/16] %v1764, 128
        %1773 = vxpose.xlu0.b32.cont [2/16] %v1765, 128
        %1774 = vxpose.xlu0.b32.cont [3/16] %v1766, 128
        %1775 = vxpose.xlu0.b32.cont [4/16] %v1767, 128
        %1776 = vxpose.xlu0.b32.cont [5/16] %v1768, 128
        %1777 = vxpose.xlu0.b32.cont [6/16] %v1769, 128
        %1778 = vxpose.xlu0.b32.cont [7/16] %v1770, 128
        %1779 = vxpose.xlu0.b32.cont [8/16] %v1771, 128
        %1780 = vxpose.xlu0.b32.cont [9/16] 0.0, 128
        %1781 = vxpose.xlu0.b32.cont [10/16] 0.0, 128
        %1782 = vxpose.xlu0.b32.cont [11/16] 0.0, 128
        %1783 = vxpose.xlu0.b32.cont [12/16] 0.0, 128
        %1784 = vxpose.xlu0.b32.cont [13/16] 0.0, 128
        %1785 = vxpose.xlu0.b32.cont [14/16] 0.0, 128
        %1786 = vxpose.xlu0.b32.cont [15/16] 0.0, 128
        %1787 = vxpose.xlu0.b32.end [16/16] 0.0, 128
        %v1788 = vpop.trf.xlu0
        %v1789 = vpop.trf.xlu0
        %v1790 = vpop.trf.xlu0
        %v1791 = vpop.trf.xlu0
        %v1792 = vpop.trf.xlu0
        %v1793 = vpop.trf.xlu0
        %v1794 = vpop.trf.xlu0
        %v1795 = vpop.trf.xlu0
        %v1796 = vpop.trf.xlu0
        %v1797 = vpop.trf.xlu0
        %v1798 = vpop.trf.xlu0
        %v1799 = vpop.trf.xlu0
        %v1800 = vpop.trf.xlu0
        %v1801 = vpop.trf.xlu0
        %v1802 = vpop.trf.xlu0
        %v1803 = vpop.trf.xlu0
        %1804 = vst.msk [vmem:[%s325] sm:$0xff] %vm1546, %v1788
        %s1805 = sand.u32 %s225, 1
        %s1806 = scalar_lea.sflag [#allocation5], %s1805
        %s1807 = sand.u32 %s225, 1
        %s1808 = smul.addr %s1807, 8
        %s1809 = scalar_lea.vmem [#allocation4], %s1808
        // Predicated region
        $region57: #{tpu_custom_call.1} parent=55 // pred_check
          %p1810 = pneg %p235
        $region58: #{tpu_custom_call.1} parent=55 // pred_check_branch
          %1812 = sbr.rel (%p1810) target = $region60
        $region59: #{tpu_custom_call.1} parent=55 // pred_region
          %s1814 = ssub.s32 128, 128
          %1815 = vsyncadd %s1806, %s1814
          %s1816 = smul.addr %s23, 128
          %s1817 = scalar_lea.hbm %s9, %s1816
          %s1819 = sshll.u32 %s1809, 4
          %s1820 = int_to_ptr.vmem [resolvable:$true] %s1819
          %1822 = dma.vmem_to_hbm [thread:$0]  %s1820, 128, %s1817, %s1806
        $region60: #{tpu_custom_call.1} parent=55 // pred_fallthru
          _
      $region56: #{tpu_custom_call.1} parent=5 // pred_fallthru
        _
      %p1823 = scmp.le.s32.totalorder 2, %s18
      // Predicated region
      $region61: #{tpu_custom_call.1} parent=5 // pred_check
        %p1824 = pneg %p1823
      $region62: #{tpu_custom_call.1} parent=5 // pred_check_branch
        %1826 = sbr.rel (%p1824) target = $region64
      $region63: #{tpu_custom_call.1} parent=5 // pred_region
        %s1827 = ssub.s32 %s18, 2
        // Predicated region
        $region65: #{tpu_custom_call.1} parent=63 // pred_check
          %p1828 = pneg %p241
        $region66: #{tpu_custom_call.1} parent=63 // pred_check_branch
          %1830 = sbr.rel (%p1828) target = $region68
        $region67: #{tpu_custom_call.1} parent=63 // pred_region
          %s1831 = sand.u32 %s226, 1
          %s1832 = scalar_lea.sflag [#allocation5], %s1831
          %s1833 = sand.u32 %s226, 1
          %s1834 = smul.addr %s1833, 8
          %s1835 = scalar_lea.vmem [#allocation4], %s1834
          %1836 = dma.done %s1832, 128
        $region68: #{tpu_custom_call.1} parent=63 // pred_fallthru
          _
      $region64: #{tpu_custom_call.1} parent=5 // pred_fallthru
        _
    $region6: #{tpu_custom_call.1} parent=1 // loop_footer
      %s22 = sadd.s32 1, %s18
    $region7: #{tpu_custom_call.1} parent=1 // loop_footer_branch
      %17 = sbr.rel target = $region3
    $region8: #{tpu_custom_call.1} parent=1 // loop_exit
      _
    %1837 = vsyncpa [#allocation5], 1
    %s1838 = scalar_lea.sflag [#allocation5], 1
    %1839 = vsyncpa %s1838, 1

</llo_original>
